<compile_context>
chip_gen: v7x
topology: tpu7x:2x2x1
jax: 0.10.0
libtpu: 0.0.40
codegen_flags: <defaults>
</compile_context>

<pallas_src>
import functools

import jax
import jax.numpy as jnp
import numpy as np
from jax.experimental import pallas as pl
from jax.experimental.pallas import tpu as pltpu

LANE = 128
SUBLANE = 8


def _rup(x, m):
    return ((x + m - 1) // m) * m


def _mlp_offsets(d_ah, d_aout, d_prjh):
    """Row offsets (all sublane-aligned) of each piece inside the MLP slab."""
    off, r = {}, 0
    off["we"] = r; r += _rup(d_ah, SUBLANE)
    off["be"] = r; r += SUBLANE
    off["w1"] = r; r += _rup(d_aout, SUBLANE)
    off["b1"] = r; r += SUBLANE
    off["w2"] = r; r += _rup(d_prjh, SUBLANE)
    off["b2"] = r; r += SUBLANE
    off["w3"] = r; r += _rup(d_prjh, SUBLANE)
    off["b3"] = r; r += SUBLANE
    off["rows"] = r
    return off


# ----------------------------------------------------------------------------
# Pallas kernel: masked LSTM recurrence + encoder linear + SubNet MLP.
# Single grid point; everything lives in VMEM / vregs (tiny shapes).
# ----------------------------------------------------------------------------
def usa_a_kernel(x_ref, len_ref, lstm_ref, mlp_ref, out_ref, *,
                 T, B_pad, Din, H, d_aout, d_prjh, r_wh, r_b, mo):
    GP = LANE  # per-gate lane-padded width (each gate owns a 128-lane block)

    # --- LSTM parameters: static sublane-aligned views of one coalesced slab ---
    wx = lstm_ref[0:Din, :]            # (Din, 4*GP)
    wh = lstm_ref[r_wh:r_wh + H, :]    # (H,   4*GP)  contraction dim = H, not 128
    b = lstm_ref[r_b:r_b + 1, :]       # (1,   4*GP)  b_ih + b_hh, gate-padded

    # Hoisted input projection: one matmul over all T steps instead of T small ones.
    xw_all = jnp.dot(x_ref[...], wx, preferred_element_type=jnp.float32) + b  # (T*B_pad, 4*GP)

    lens = len_ref[...]                                           # (B_pad, 1) int32

    h = jnp.zeros((B_pad, H), jnp.float32)
    c = jnp.zeros((B_pad, H), jnp.float32)

    # Serial recurrence, fully unrolled; h/c stay in vregs.
    # TODO(synk): for long sequences move time onto an "arbitrary" grid axis with h/c in
    # VMEM scratch (pl.when init/finalize) + lax.fori_loop, and hold wh in MXU staging
    # registers (pltpu.matmul_push_rhs / matmul_acc_lhs) instead of re-pushing it each step.
    for t in range(T):
        gates = (xw_all[t * B_pad:(t + 1) * B_pad, :]
                 + jnp.dot(h, wh, preferred_element_type=jnp.float32))     # (B_pad, 4*GP)
        # PyTorch gate order i, f, g, o; each gate starts at a 128-lane-aligned offset.
        i_g = jax.nn.sigmoid(gates[:, 0 * GP:0 * GP + H])
        f_g = jax.nn.sigmoid(gates[:, 1 * GP:1 * GP + H])
        g_g = jnp.tanh(gates[:, 2 * GP:2 * GP + H])
        o_g = jax.nn.sigmoid(gates[:, 3 * GP:3 * GP + H])
        c_new = f_g * c + i_g * g_g
        h_new = o_g * jnp.tanh(c_new)
        # pack_padded_sequence semantics: state frozen once t >= length[b].
        m = jnp.broadcast_to(lens > t, (B_pad, H))
        h = jnp.where(m, h_new, h)
        c = jnp.where(m, c_new, c)

    # --- RNNEncoder.linear_1 + SubNet (dropout = identity in eval mode) ---------
    we = mlp_ref[mo["we"]:mo["we"] + H, 0:d_aout]
    be = mlp_ref[mo["be"]:mo["be"] + 1, 0:d_aout]
    w1 = mlp_ref[mo["w1"]:mo["w1"] + d_aout, 0:d_prjh]
    b1 = mlp_ref[mo["b1"]:mo["b1"] + 1, 0:d_prjh]
    w2 = mlp_ref[mo["w2"]:mo["w2"] + d_prjh, 0:d_prjh]
    b2 = mlp_ref[mo["b2"]:mo["b2"] + 1, 0:d_prjh]
    w3 = mlp_ref[mo["w3"]:mo["w3"] + d_prjh, :]   # (d_prjh, 128): lane-dense output slab
    b3 = mlp_ref[mo["b3"]:mo["b3"] + 1, :]

    enc = jnp.dot(h, we, preferred_element_type=jnp.float32) + be
    y1 = jnp.tanh(jnp.dot(enc, w1, preferred_element_type=jnp.float32) + b1)
    y2 = jnp.tanh(jnp.dot(y1, w2, preferred_element_type=jnp.float32) + b2)
    # NOTE: for strict fp32 parity with PyTorch beyond ~1e-3, add
    # precision=jax.lax.Precision.HIGHEST to the dots (negligible cost at these sizes).
    out_ref[...] = jnp.dot(y2, w3, preferred_element_type=jnp.float32) + b3   # (B_pad, 128)


# ----------------------------------------------------------------------------
# One-time parameter packing (hoisted out of the per-call hot path).
# ----------------------------------------------------------------------------
def prepare_params(tp, *, d_ain, d_ah, d_aout, d_prjh, n_class):
    """Pack PyTorch-layout weights into two lane/sublane-aligned VMEM slabs. Call ONCE."""
    H, Din, GP = d_ah, d_ain, LANE

    def gate_pad(w2d):
        # (rows, 4H) -> (rows, 4*GP): each PyTorch gate block (i,f,g,o) gets its own
        # zero-padded 128-lane slab so in-kernel gate extraction is lane-aligned.
        return np.concatenate(
            [np.pad(w2d[:, k * H:(k + 1) * H], ((0, 0), (0, GP - H))) for k in range(4)],
            axis=1)

    wx = gate_pad(np.asarray(tp["w_ih"]).T)                                     # (Din, 4*GP)
    wh = gate_pad(np.asarray(tp["w_hh"]).T)                                     # (H,   4*GP)
    b = gate_pad((np.asarray(tp["b_ih"]) + np.asarray(tp["b_hh"]))[None, :])    # (1,   4*GP)

    r_wh = _rup(Din, SUBLANE)
    r_b = r_wh + _rup(H, SUBLANE)
    lstm = np.zeros((r_b + SUBLANE, 4 * GP), np.float32)
    lstm[0:Din] = wx
    lstm[r_wh:r_wh + H] = wh
    lstm[r_b] = b[0]

    mo = _mlp_offsets(H, d_aout, d_prjh)
    mlp = np.zeros((mo["rows"], LANE), np.float32)
    mlp[mo["we"]:mo["we"] + H, 0:d_aout] = np.asarray(tp["w_enc"]).T
    mlp[mo["be"], 0:d_aout] = np.asarray(tp["b_enc"])
    mlp[mo["w1"]:mo["w1"] + d_aout, 0:d_prjh] = np.asarray(tp["w1"]).T
    mlp[mo["b1"], 0:d_prjh] = np.asarray(tp["b1"])
    mlp[mo["w2"]:mo["w2"] + d_prjh, 0:d_prjh] = np.asarray(tp["w2"]).T
    mlp[mo["b2"], 0:d_prjh] = np.asarray(tp["b2"])
    mlp[mo["w3"]:mo["w3"] + d_prjh, 0:n_class] = np.asarray(tp["w3"]).T    # lane-dense out
    mlp[mo["b3"], 0:n_class] = np.asarray(tp["b3"])

    return dict(
        lstm_slab=jnp.asarray(lstm), mlp_slab=jnp.asarray(mlp),
        r_wh=r_wh, r_b=r_b, mlp_offsets=mo,
        dims=dict(d_ain=d_ain, d_ah=d_ah, d_aout=d_aout, d_prjh=d_prjh, n_class=n_class),
    )


# ----------------------------------------------------------------------------
# Per-call forward (jit-able; only tiny activation pad/flatten in the hot path).
# ----------------------------------------------------------------------------
def usa_a_forward(acoustic, a_len, prep):
    """acoustic: (T, B, d_ain) f32, a_len: (B,) int, prep: output of prepare_params."""
    d = prep["dims"]
    T, B, Din = acoustic.shape
    B_pad = _rup(max(B, 1), SUBLANE)

    # Pad batch to a sublane multiple and flatten time-major so per-step slices of the
    # hoisted input projection are tile-aligned. Padded rows get length 0 (state stays 0).
    x_pad = jnp.pad(acoustic, ((0, 0), (0, B_pad - B), (0, 0))).reshape(T * B_pad, Din)
    len_pad = jnp.pad(a_len.astype(jnp.int32), (0, B_pad - B)).reshape(B_pad, 1)

    kernel = functools.partial(
        usa_a_kernel, T=T, B_pad=B_pad, Din=Din, H=d["d_ah"],
        d_aout=d["d_aout"], d_prjh=d["d_prjh"],
        r_wh=prep["r_wh"], r_b=prep["r_b"], mo=prep["mlp_offsets"])

    vmem = pl.BlockSpec(memory_space=pltpu.MemorySpace.VMEM)
    out = pl.pallas_call(
        kernel,
        out_shape=jax.ShapeDtypeStruct((B_pad, LANE), jnp.float32),
        in_specs=[vmem] * 4,
        out_specs=vmem,
    )(x_pad, len_pad, prep["lstm_slab"], prep["mlp_slab"])
    # TODO(synk): for production batch sizes add a "parallel" grid axis over batch chunks so
    # both v7x TensorCores get work; at B<=8 a single grid point is correct and simplest.
    return out[:B, :d["n_class"]]


# ----------------------------------------------------------------------------
# Pure-JAX reference (natural layout, same math) for the correctness check.
# ----------------------------------------------------------------------------
def usa_a_reference(acoustic, a_len, tp):
    T, B, _ = acoustic.shape
    H = tp["w_hh"].shape[1]
    wx, wh, b = tp["w_ih"].T, tp["w_hh"].T, tp["b_ih"] + tp["b_hh"]
    h = jnp.zeros((B, H), jnp.float32)
    c = jnp.zeros((B, H), jnp.float32)
    for t in range(T):
        gates = acoustic[t] @ wx + h @ wh + b
        i_g, f_g, g_g, o_g = jnp.split(gates, 4, axis=1)
        i_g, f_g, o_g = jax.nn.sigmoid(i_g), jax.nn.sigmoid(f_g), jax.nn.sigmoid(o_g)
        g_g = jnp.tanh(g_g)
        c_new = f_g * c + i_g * g_g
        h_new = o_g * jnp.tanh(c_new)
        mask = (a_len > t)[:, None]
        h = jnp.where(mask, h_new, h)
        c = jnp.where(mask, c_new, c)
    enc = h @ tp["w_enc"].T + tp["b_enc"]
    y1 = jnp.tanh(enc @ tp["w1"].T + tp["b1"])
    y2 = jnp.tanh(y1 @ tp["w2"].T + tp["b2"])
    return y2 @ tp["w3"].T + tp["b3"]


# ----------------------------------------------------------------------------
# Deterministic parameter construction (PyTorch layouts; synthetic init).
# ----------------------------------------------------------------------------
def init_params(key, d_ain, d_ah, d_aout, d_prjh, n_class):
    ks = jax.random.split(key, 12)

    def unif(k, shape, fan_in):
        bound = 1.0 / np.sqrt(fan_in)
        return jax.random.uniform(k, shape, jnp.float32, -bound, bound)

    return dict(
        # nn.LSTM(d_ain, d_ah, num_layers=1, bidirectional=False)
        w_ih=unif(ks[0], (4 * d_ah, d_ain), d_ah),
        w_hh=unif(ks[1], (4 * d_ah, d_ah), d_ah),
        b_ih=unif(ks[2], (4 * d_ah,), d_ah),
        b_hh=unif(ks[3], (4 * d_ah,), d_ah),
        # RNNEncoder.linear_1: Linear(d_ah -> d_aout)
        w_enc=unif(ks[4], (d_aout, d_ah), d_ah),
        b_enc=unif(ks[5], (d_aout,), d_ah),
        # SubNet: Linear(d_aout -> d_prjh), Linear(d_prjh -> d_prjh), Linear(d_prjh -> n_class)
        w1=unif(ks[6], (d_prjh, d_aout), d_aout),
        b1=unif(ks[7], (d_prjh,), d_aout),
        w2=unif(ks[8], (d_prjh, d_prjh), d_prjh),
        b2=unif(ks[9], (d_prjh,), d_prjh),
        w3=unif(ks[10], (n_class, d_prjh), d_prjh),
        b3=unif(ks[11], (n_class,), d_prjh),
    )


if __name__ == "__main__":
    # Small hp: d_ain=8, d_ah=16, d_aout=16, d_prjh=32, n_class=1, n_layer=1,
    # bidirectional=False (all dropouts are identity at inference).
    T, B = 8, 4
    d_ain, d_ah, d_aout, d_prjh, n_class = 8, 16, 16, 32, 1

    key = jax.random.PRNGKey(0)
    k_x, k_p = jax.random.split(key)
    acoustic = jax.random.normal(k_x, (T, B, d_ain), jnp.float32)   # (seq, batch, feat)
    a_len = jnp.array([8, 5, 3, 6], dtype=jnp.int32)                # per-example lengths

    tp = init_params(k_p, d_ain, d_ah, d_aout, d_prjh, n_class)
    # One-time preprocessing (hoisted out of the hot path; reuse `prep` for every call).
    prep = prepare_params(tp, d_ain=d_ain, d_ah=d_ah, d_aout=d_aout,
                          d_prjh=d_prjh, n_class=n_class)

    fwd = jax.jit(lambda ac, ln: usa_a_forward(ac, ln, prep))
    preds_a = jax.block_until_ready(fwd(acoustic, a_len))

    ref = jax.block_until_ready(usa_a_reference(acoustic, a_len, tp))
    np.testing.assert_allclose(np.asarray(preds_a), np.asarray(ref), rtol=1e-3, atol=1e-4)

    print("KERNEL_OK")
</pallas_src>

<mosaic_0001>
module attributes {stable_mosaic.version = 11 : i64} {
  func.func @usa_a_kernel(%arg0: memref<64x8xf32, #tpu.memory_space<vmem>>, %arg1: memref<8x1xi32, #tpu.memory_space<vmem>>, %arg2: memref<32x512xf32, #tpu.memory_space<vmem>>, %arg3: memref<128x128xf32, #tpu.memory_space<vmem>>, %arg4: memref<8x128xf32, #tpu.memory_space<vmem>>) attributes {dimension_semantics = [], scalar_prefetch = 0 : i64, scratch_operands = 0 : i64, tpu.core_type = #tpu.core_type<tc>} {
    %c0 = arith.constant 0 : index
    %c0_0 = arith.constant 0 : index
    %0 = vector.load %arg2[%c0, %c0_0] : memref<32x512xf32, #tpu.memory_space<vmem>>, vector<8x512xf32>
    %c8 = arith.constant 8 : index
    %c0_1 = arith.constant 0 : index
    %1 = vector.load %arg2[%c8, %c0_1] : memref<32x512xf32, #tpu.memory_space<vmem>>, vector<16x512xf32>
    %c24 = arith.constant 24 : index
    %c0_2 = arith.constant 0 : index
    %2 = vector.load %arg2[%c24, %c0_2] : memref<32x512xf32, #tpu.memory_space<vmem>>, vector<1x512xf32>
    %c0_3 = arith.constant 0 : index
    %c0_4 = arith.constant 0 : index
    %3 = vector.load %arg0[%c0_3, %c0_4] : memref<64x8xf32, #tpu.memory_space<vmem>>, vector<64x8xf32>
    %cst = arith.constant dense<0.000000e+00> : vector<64x512xf32>
    %4 = tpu.matmul %3, %0, %cst {dimension_numbers = #tpu.dot_dimension_numbers<[1], [0], [0], [1], [0, 0, 1, 1], [], []>} : vector<64x8xf32>, vector<8x512xf32>, vector<64x512xf32> -> vector<64x512xf32>
    %5 = vector.broadcast %2 : vector<1x512xf32> to vector<64x512xf32>
    %6 = arith.addf %4, %5 : vector<64x512xf32>
    %c0_5 = arith.constant 0 : index
    %c0_6 = arith.constant 0 : index
    %7 = vector.load %arg1[%c0_5, %c0_6] : memref<8x1xi32, #tpu.memory_space<vmem>>, vector<8x1xi32>
    %cst_7 = arith.constant 0.000000e+00 : f32
    %8 = vector.broadcast %cst_7 : f32 to vector<8x16xf32>
    %cst_8 = arith.constant 0.000000e+00 : f32
    %9 = vector.broadcast %cst_8 : f32 to vector<8x16xf32>
    %10 = vector.extract_strided_slice %6 {offsets = [0, 0], sizes = [8, 512], strides = [1, 1]} : vector<64x512xf32> to vector<8x512xf32>
    %cst_9 = arith.constant dense<0.000000e+00> : vector<8x512xf32>
    %11 = tpu.matmul %8, %1, %cst_9 {dimension_numbers = #tpu.dot_dimension_numbers<[1], [0], [0], [1], [0, 0, 1, 1], [], []>} : vector<8x16xf32>, vector<16x512xf32>, vector<8x512xf32> -> vector<8x512xf32>
    %12 = arith.addf %10, %11 : vector<8x512xf32>
    %13 = vector.extract_strided_slice %12 {offsets = [0, 0], sizes = [8, 16], strides = [1, 1]} : vector<8x512xf32> to vector<8x16xf32>
    %14 = arith.negf %13 : vector<8x16xf32>
    %15 = math.exp %14 : vector<8x16xf32>
    %cst_10 = arith.constant 1.000000e+00 : f32
    %16 = vector.broadcast %cst_10 : f32 to vector<8x16xf32>
    %17 = arith.addf %16, %15 : vector<8x16xf32>
    %18 = arith.divf %16, %17 : vector<8x16xf32>
    %19 = vector.extract_strided_slice %12 {offsets = [0, 128], sizes = [8, 16], strides = [1, 1]} : vector<8x512xf32> to vector<8x16xf32>
    %20 = arith.negf %19 : vector<8x16xf32>
    %21 = math.exp %20 : vector<8x16xf32>
    %cst_11 = arith.constant 1.000000e+00 : f32
    %22 = vector.broadcast %cst_11 : f32 to vector<8x16xf32>
    %23 = arith.addf %22, %21 : vector<8x16xf32>
    %24 = arith.divf %22, %23 : vector<8x16xf32>
    %25 = vector.extract_strided_slice %12 {offsets = [0, 256], sizes = [8, 16], strides = [1, 1]} : vector<8x512xf32> to vector<8x16xf32>
    %26 = math.tanh %25 : vector<8x16xf32>
    %27 = vector.extract_strided_slice %12 {offsets = [0, 384], sizes = [8, 16], strides = [1, 1]} : vector<8x512xf32> to vector<8x16xf32>
    %28 = arith.negf %27 : vector<8x16xf32>
    %29 = math.exp %28 : vector<8x16xf32>
    %cst_12 = arith.constant 1.000000e+00 : f32
    %30 = vector.broadcast %cst_12 : f32 to vector<8x16xf32>
    %31 = arith.addf %30, %29 : vector<8x16xf32>
    %32 = arith.divf %30, %31 : vector<8x16xf32>
    %33 = arith.mulf %24, %9 : vector<8x16xf32>
    %34 = arith.mulf %18, %26 : vector<8x16xf32>
    %35 = arith.addf %33, %34 : vector<8x16xf32>
    %36 = math.tanh %35 : vector<8x16xf32>
    %37 = arith.mulf %32, %36 : vector<8x16xf32>
    %c0_i32 = arith.constant 0 : i32
    %38 = vector.broadcast %c0_i32 : i32 to vector<8x1xi32>
    %39 = arith.cmpi sgt, %7, %38 : vector<8x1xi32>
    %40 = vector.shape_cast %39 : vector<8x1xi1> to vector<8x1xi1>
    %41 = vector.broadcast %40 : vector<8x1xi1> to vector<8x16xi1>
    %42 = arith.select %41, %37, %8 : vector<8x16xi1>, vector<8x16xf32>
    %43 = arith.select %41, %35, %9 : vector<8x16xi1>, vector<8x16xf32>
    %44 = vector.extract_strided_slice %6 {offsets = [8, 0], sizes = [8, 512], strides = [1, 1]} : vector<64x512xf32> to vector<8x512xf32>
    %cst_13 = arith.constant dense<0.000000e+00> : vector<8x512xf32>
    %45 = tpu.matmul %42, %1, %cst_13 {dimension_numbers = #tpu.dot_dimension_numbers<[1], [0], [0], [1], [0, 0, 1, 1], [], []>} : vector<8x16xf32>, vector<16x512xf32>, vector<8x512xf32> -> vector<8x512xf32>
    %46 = arith.addf %44, %45 : vector<8x512xf32>
    %47 = vector.extract_strided_slice %46 {offsets = [0, 0], sizes = [8, 16], strides = [1, 1]} : vector<8x512xf32> to vector<8x16xf32>
    %48 = arith.negf %47 : vector<8x16xf32>
    %49 = math.exp %48 : vector<8x16xf32>
    %cst_14 = arith.constant 1.000000e+00 : f32
    %50 = vector.broadcast %cst_14 : f32 to vector<8x16xf32>
    %51 = arith.addf %50, %49 : vector<8x16xf32>
    %52 = arith.divf %50, %51 : vector<8x16xf32>
    %53 = vector.extract_strided_slice %46 {offsets = [0, 128], sizes = [8, 16], strides = [1, 1]} : vector<8x512xf32> to vector<8x16xf32>
    %54 = arith.negf %53 : vector<8x16xf32>
    %55 = math.exp %54 : vector<8x16xf32>
    %cst_15 = arith.constant 1.000000e+00 : f32
    %56 = vector.broadcast %cst_15 : f32 to vector<8x16xf32>
    %57 = arith.addf %56, %55 : vector<8x16xf32>
    %58 = arith.divf %56, %57 : vector<8x16xf32>
    %59 = vector.extract_strided_slice %46 {offsets = [0, 256], sizes = [8, 16], strides = [1, 1]} : vector<8x512xf32> to vector<8x16xf32>
    %60 = math.tanh %59 : vector<8x16xf32>
    %61 = vector.extract_strided_slice %46 {offsets = [0, 384], sizes = [8, 16], strides = [1, 1]} : vector<8x512xf32> to vector<8x16xf32>
    %62 = arith.negf %61 : vector<8x16xf32>
    %63 = math.exp %62 : vector<8x16xf32>
    %cst_16 = arith.constant 1.000000e+00 : f32
    %64 = vector.broadcast %cst_16 : f32 to vector<8x16xf32>
    %65 = arith.addf %64, %63 : vector<8x16xf32>
    %66 = arith.divf %64, %65 : vector<8x16xf32>
    %67 = arith.mulf %58, %43 : vector<8x16xf32>
    %68 = arith.mulf %52, %60 : vector<8x16xf32>
    %69 = arith.addf %67, %68 : vector<8x16xf32>
    %70 = math.tanh %69 : vector<8x16xf32>
    %71 = arith.mulf %66, %70 : vector<8x16xf32>
    %c1_i32 = arith.constant 1 : i32
    %72 = vector.broadcast %c1_i32 : i32 to vector<8x1xi32>
    %73 = arith.cmpi sgt, %7, %72 : vector<8x1xi32>
    %74 = vector.shape_cast %73 : vector<8x1xi1> to vector<8x1xi1>
    %75 = vector.broadcast %74 : vector<8x1xi1> to vector<8x16xi1>
    %76 = arith.select %75, %71, %42 : vector<8x16xi1>, vector<8x16xf32>
    %77 = arith.select %75, %69, %43 : vector<8x16xi1>, vector<8x16xf32>
    %78 = vector.extract_strided_slice %6 {offsets = [16, 0], sizes = [8, 512], strides = [1, 1]} : vector<64x512xf32> to vector<8x512xf32>
    %cst_17 = arith.constant dense<0.000000e+00> : vector<8x512xf32>
    %79 = tpu.matmul %76, %1, %cst_17 {dimension_numbers = #tpu.dot_dimension_numbers<[1], [0], [0], [1], [0, 0, 1, 1], [], []>} : vector<8x16xf32>, vector<16x512xf32>, vector<8x512xf32> -> vector<8x512xf32>
    %80 = arith.addf %78, %79 : vector<8x512xf32>
    %81 = vector.extract_strided_slice %80 {offsets = [0, 0], sizes = [8, 16], strides = [1, 1]} : vector<8x512xf32> to vector<8x16xf32>
    %82 = arith.negf %81 : vector<8x16xf32>
    %83 = math.exp %82 : vector<8x16xf32>
    %cst_18 = arith.constant 1.000000e+00 : f32
    %84 = vector.broadcast %cst_18 : f32 to vector<8x16xf32>
    %85 = arith.addf %84, %83 : vector<8x16xf32>
    %86 = arith.divf %84, %85 : vector<8x16xf32>
    %87 = vector.extract_strided_slice %80 {offsets = [0, 128], sizes = [8, 16], strides = [1, 1]} : vector<8x512xf32> to vector<8x16xf32>
    %88 = arith.negf %87 : vector<8x16xf32>
    %89 = math.exp %88 : vector<8x16xf32>
    %cst_19 = arith.constant 1.000000e+00 : f32
    %90 = vector.broadcast %cst_19 : f32 to vector<8x16xf32>
    %91 = arith.addf %90, %89 : vector<8x16xf32>
    %92 = arith.divf %90, %91 : vector<8x16xf32>
    %93 = vector.extract_strided_slice %80 {offsets = [0, 256], sizes = [8, 16], strides = [1, 1]} : vector<8x512xf32> to vector<8x16xf32>
    %94 = math.tanh %93 : vector<8x16xf32>
    %95 = vector.extract_strided_slice %80 {offsets = [0, 384], sizes = [8, 16], strides = [1, 1]} : vector<8x512xf32> to vector<8x16xf32>
    %96 = arith.negf %95 : vector<8x16xf32>
    %97 = math.exp %96 : vector<8x16xf32>
    %cst_20 = arith.constant 1.000000e+00 : f32
    %98 = vector.broadcast %cst_20 : f32 to vector<8x16xf32>
    %99 = arith.addf %98, %97 : vector<8x16xf32>
    %100 = arith.divf %98, %99 : vector<8x16xf32>
    %101 = arith.mulf %92, %77 : vector<8x16xf32>
    %102 = arith.mulf %86, %94 : vector<8x16xf32>
    %103 = arith.addf %101, %102 : vector<8x16xf32>
    %104 = math.tanh %103 : vector<8x16xf32>
    %105 = arith.mulf %100, %104 : vector<8x16xf32>
    %c2_i32 = arith.constant 2 : i32
    %106 = vector.broadcast %c2_i32 : i32 to vector<8x1xi32>
    %107 = arith.cmpi sgt, %7, %106 : vector<8x1xi32>
    %108 = vector.shape_cast %107 : vector<8x1xi1> to vector<8x1xi1>
    %109 = vector.broadcast %108 : vector<8x1xi1> to vector<8x16xi1>
    %110 = arith.select %109, %105, %76 : vector<8x16xi1>, vector<8x16xf32>
    %111 = arith.select %109, %103, %77 : vector<8x16xi1>, vector<8x16xf32>
    %112 = vector.extract_strided_slice %6 {offsets = [24, 0], sizes = [8, 512], strides = [1, 1]} : vector<64x512xf32> to vector<8x512xf32>
    %cst_21 = arith.constant dense<0.000000e+00> : vector<8x512xf32>
    %113 = tpu.matmul %110, %1, %cst_21 {dimension_numbers = #tpu.dot_dimension_numbers<[1], [0], [0], [1], [0, 0, 1, 1], [], []>} : vector<8x16xf32>, vector<16x512xf32>, vector<8x512xf32> -> vector<8x512xf32>
    %114 = arith.addf %112, %113 : vector<8x512xf32>
    %115 = vector.extract_strided_slice %114 {offsets = [0, 0], sizes = [8, 16], strides = [1, 1]} : vector<8x512xf32> to vector<8x16xf32>
    %116 = arith.negf %115 : vector<8x16xf32>
    %117 = math.exp %116 : vector<8x16xf32>
    %cst_22 = arith.constant 1.000000e+00 : f32
    %118 = vector.broadcast %cst_22 : f32 to vector<8x16xf32>
    %119 = arith.addf %118, %117 : vector<8x16xf32>
    %120 = arith.divf %118, %119 : vector<8x16xf32>
    %121 = vector.extract_strided_slice %114 {offsets = [0, 128], sizes = [8, 16], strides = [1, 1]} : vector<8x512xf32> to vector<8x16xf32>
    %122 = arith.negf %121 : vector<8x16xf32>
    %123 = math.exp %122 : vector<8x16xf32>
    %cst_23 = arith.constant 1.000000e+00 : f32
    %124 = vector.broadcast %cst_23 : f32 to vector<8x16xf32>
    %125 = arith.addf %124, %123 : vector<8x16xf32>
    %126 = arith.divf %124, %125 : vector<8x16xf32>
    %127 = vector.extract_strided_slice %114 {offsets = [0, 256], sizes = [8, 16], strides = [1, 1]} : vector<8x512xf32> to vector<8x16xf32>
    %128 = math.tanh %127 : vector<8x16xf32>
    %129 = vector.extract_strided_slice %114 {offsets = [0, 384], sizes = [8, 16], strides = [1, 1]} : vector<8x512xf32> to vector<8x16xf32>
    %130 = arith.negf %129 : vector<8x16xf32>
    %131 = math.exp %130 : vector<8x16xf32>
    %cst_24 = arith.constant 1.000000e+00 : f32
    %132 = vector.broadcast %cst_24 : f32 to vector<8x16xf32>
    %133 = arith.addf %132, %131 : vector<8x16xf32>
    %134 = arith.divf %132, %133 : vector<8x16xf32>
    %135 = arith.mulf %126, %111 : vector<8x16xf32>
    %136 = arith.mulf %120, %128 : vector<8x16xf32>
    %137 = arith.addf %135, %136 : vector<8x16xf32>
    %138 = math.tanh %137 : vector<8x16xf32>
    %139 = arith.mulf %134, %138 : vector<8x16xf32>
    %c3_i32 = arith.constant 3 : i32
    %140 = vector.broadcast %c3_i32 : i32 to vector<8x1xi32>
    %141 = arith.cmpi sgt, %7, %140 : vector<8x1xi32>
    %142 = vector.shape_cast %141 : vector<8x1xi1> to vector<8x1xi1>
    %143 = vector.broadcast %142 : vector<8x1xi1> to vector<8x16xi1>
    %144 = arith.select %143, %139, %110 : vector<8x16xi1>, vector<8x16xf32>
    %145 = arith.select %143, %137, %111 : vector<8x16xi1>, vector<8x16xf32>
    %146 = vector.extract_strided_slice %6 {offsets = [32, 0], sizes = [8, 512], strides = [1, 1]} : vector<64x512xf32> to vector<8x512xf32>
    %cst_25 = arith.constant dense<0.000000e+00> : vector<8x512xf32>
    %147 = tpu.matmul %144, %1, %cst_25 {dimension_numbers = #tpu.dot_dimension_numbers<[1], [0], [0], [1], [0, 0, 1, 1], [], []>} : vector<8x16xf32>, vector<16x512xf32>, vector<8x512xf32> -> vector<8x512xf32>
    %148 = arith.addf %146, %147 : vector<8x512xf32>
    %149 = vector.extract_strided_slice %148 {offsets = [0, 0], sizes = [8, 16], strides = [1, 1]} : vector<8x512xf32> to vector<8x16xf32>
    %150 = arith.negf %149 : vector<8x16xf32>
    %151 = math.exp %150 : vector<8x16xf32>
    %cst_26 = arith.constant 1.000000e+00 : f32
    %152 = vector.broadcast %cst_26 : f32 to vector<8x16xf32>
    %153 = arith.addf %152, %151 : vector<8x16xf32>
    %154 = arith.divf %152, %153 : vector<8x16xf32>
    %155 = vector.extract_strided_slice %148 {offsets = [0, 128], sizes = [8, 16], strides = [1, 1]} : vector<8x512xf32> to vector<8x16xf32>
    %156 = arith.negf %155 : vector<8x16xf32>
    %157 = math.exp %156 : vector<8x16xf32>
    %cst_27 = arith.constant 1.000000e+00 : f32
    %158 = vector.broadcast %cst_27 : f32 to vector<8x16xf32>
    %159 = arith.addf %158, %157 : vector<8x16xf32>
    %160 = arith.divf %158, %159 : vector<8x16xf32>
    %161 = vector.extract_strided_slice %148 {offsets = [0, 256], sizes = [8, 16], strides = [1, 1]} : vector<8x512xf32> to vector<8x16xf32>
    %162 = math.tanh %161 : vector<8x16xf32>
    %163 = vector.extract_strided_slice %148 {offsets = [0, 384], sizes = [8, 16], strides = [1, 1]} : vector<8x512xf32> to vector<8x16xf32>
    %164 = arith.negf %163 : vector<8x16xf32>
    %165 = math.exp %164 : vector<8x16xf32>
    %cst_28 = arith.constant 1.000000e+00 : f32
    %166 = vector.broadcast %cst_28 : f32 to vector<8x16xf32>
    %167 = arith.addf %166, %165 : vector<8x16xf32>
    %168 = arith.divf %166, %167 : vector<8x16xf32>
    %169 = arith.mulf %160, %145 : vector<8x16xf32>
    %170 = arith.mulf %154, %162 : vector<8x16xf32>
    %171 = arith.addf %169, %170 : vector<8x16xf32>
    %172 = math.tanh %171 : vector<8x16xf32>
    %173 = arith.mulf %168, %172 : vector<8x16xf32>
    %c4_i32 = arith.constant 4 : i32
    %174 = vector.broadcast %c4_i32 : i32 to vector<8x1xi32>
    %175 = arith.cmpi sgt, %7, %174 : vector<8x1xi32>
    %176 = vector.shape_cast %175 : vector<8x1xi1> to vector<8x1xi1>
    %177 = vector.broadcast %176 : vector<8x1xi1> to vector<8x16xi1>
    %178 = arith.select %177, %173, %144 : vector<8x16xi1>, vector<8x16xf32>
    %179 = arith.select %177, %171, %145 : vector<8x16xi1>, vector<8x16xf32>
    %180 = vector.extract_strided_slice %6 {offsets = [40, 0], sizes = [8, 512], strides = [1, 1]} : vector<64x512xf32> to vector<8x512xf32>
    %cst_29 = arith.constant dense<0.000000e+00> : vector<8x512xf32>
    %181 = tpu.matmul %178, %1, %cst_29 {dimension_numbers = #tpu.dot_dimension_numbers<[1], [0], [0], [1], [0, 0, 1, 1], [], []>} : vector<8x16xf32>, vector<16x512xf32>, vector<8x512xf32> -> vector<8x512xf32>
    %182 = arith.addf %180, %181 : vector<8x512xf32>
    %183 = vector.extract_strided_slice %182 {offsets = [0, 0], sizes = [8, 16], strides = [1, 1]} : vector<8x512xf32> to vector<8x16xf32>
    %184 = arith.negf %183 : vector<8x16xf32>
    %185 = math.exp %184 : vector<8x16xf32>
    %cst_30 = arith.constant 1.000000e+00 : f32
    %186 = vector.broadcast %cst_30 : f32 to vector<8x16xf32>
    %187 = arith.addf %186, %185 : vector<8x16xf32>
    %188 = arith.divf %186, %187 : vector<8x16xf32>
    %189 = vector.extract_strided_slice %182 {offsets = [0, 128], sizes = [8, 16], strides = [1, 1]} : vector<8x512xf32> to vector<8x16xf32>
    %190 = arith.negf %189 : vector<8x16xf32>
    %191 = math.exp %190 : vector<8x16xf32>
    %cst_31 = arith.constant 1.000000e+00 : f32
    %192 = vector.broadcast %cst_31 : f32 to vector<8x16xf32>
    %193 = arith.addf %192, %191 : vector<8x16xf32>
    %194 = arith.divf %192, %193 : vector<8x16xf32>
    %195 = vector.extract_strided_slice %182 {offsets = [0, 256], sizes = [8, 16], strides = [1, 1]} : vector<8x512xf32> to vector<8x16xf32>
    %196 = math.tanh %195 : vector<8x16xf32>
    %197 = vector.extract_strided_slice %182 {offsets = [0, 384], sizes = [8, 16], strides = [1, 1]} : vector<8x512xf32> to vector<8x16xf32>
    %198 = arith.negf %197 : vector<8x16xf32>
    %199 = math.exp %198 : vector<8x16xf32>
    %cst_32 = arith.constant 1.000000e+00 : f32
    %200 = vector.broadcast %cst_32 : f32 to vector<8x16xf32>
    %201 = arith.addf %200, %199 : vector<8x16xf32>
    %202 = arith.divf %200, %201 : vector<8x16xf32>
    %203 = arith.mulf %194, %179 : vector<8x16xf32>
    %204 = arith.mulf %188, %196 : vector<8x16xf32>
    %205 = arith.addf %203, %204 : vector<8x16xf32>
    %206 = math.tanh %205 : vector<8x16xf32>
    %207 = arith.mulf %202, %206 : vector<8x16xf32>
    %c5_i32 = arith.constant 5 : i32
    %208 = vector.broadcast %c5_i32 : i32 to vector<8x1xi32>
    %209 = arith.cmpi sgt, %7, %208 : vector<8x1xi32>
    %210 = vector.shape_cast %209 : vector<8x1xi1> to vector<8x1xi1>
    %211 = vector.broadcast %210 : vector<8x1xi1> to vector<8x16xi1>
    %212 = arith.select %211, %207, %178 : vector<8x16xi1>, vector<8x16xf32>
    %213 = arith.select %211, %205, %179 : vector<8x16xi1>, vector<8x16xf32>
    %214 = vector.extract_strided_slice %6 {offsets = [48, 0], sizes = [8, 512], strides = [1, 1]} : vector<64x512xf32> to vector<8x512xf32>
    %cst_33 = arith.constant dense<0.000000e+00> : vector<8x512xf32>
    %215 = tpu.matmul %212, %1, %cst_33 {dimension_numbers = #tpu.dot_dimension_numbers<[1], [0], [0], [1], [0, 0, 1, 1], [], []>} : vector<8x16xf32>, vector<16x512xf32>, vector<8x512xf32> -> vector<8x512xf32>
    %216 = arith.addf %214, %215 : vector<8x512xf32>
    %217 = vector.extract_strided_slice %216 {offsets = [0, 0], sizes = [8, 16], strides = [1, 1]} : vector<8x512xf32> to vector<8x16xf32>
    %218 = arith.negf %217 : vector<8x16xf32>
    %219 = math.exp %218 : vector<8x16xf32>
    %cst_34 = arith.constant 1.000000e+00 : f32
    %220 = vector.broadcast %cst_34 : f32 to vector<8x16xf32>
    %221 = arith.addf %220, %219 : vector<8x16xf32>
    %222 = arith.divf %220, %221 : vector<8x16xf32>
    %223 = vector.extract_strided_slice %216 {offsets = [0, 128], sizes = [8, 16], strides = [1, 1]} : vector<8x512xf32> to vector<8x16xf32>
    %224 = arith.negf %223 : vector<8x16xf32>
    %225 = math.exp %224 : vector<8x16xf32>
    %cst_35 = arith.constant 1.000000e+00 : f32
    %226 = vector.broadcast %cst_35 : f32 to vector<8x16xf32>
    %227 = arith.addf %226, %225 : vector<8x16xf32>
    %228 = arith.divf %226, %227 : vector<8x16xf32>
    %229 = vector.extract_strided_slice %216 {offsets = [0, 256], sizes = [8, 16], strides = [1, 1]} : vector<8x512xf32> to vector<8x16xf32>
    %230 = math.tanh %229 : vector<8x16xf32>
    %231 = vector.extract_strided_slice %216 {offsets = [0, 384], sizes = [8, 16], strides = [1, 1]} : vector<8x512xf32> to vector<8x16xf32>
    %232 = arith.negf %231 : vector<8x16xf32>
    %233 = math.exp %232 : vector<8x16xf32>
    %cst_36 = arith.constant 1.000000e+00 : f32
    %234 = vector.broadcast %cst_36 : f32 to vector<8x16xf32>
    %235 = arith.addf %234, %233 : vector<8x16xf32>
    %236 = arith.divf %234, %235 : vector<8x16xf32>
    %237 = arith.mulf %228, %213 : vector<8x16xf32>
    %238 = arith.mulf %222, %230 : vector<8x16xf32>
    %239 = arith.addf %237, %238 : vector<8x16xf32>
    %240 = math.tanh %239 : vector<8x16xf32>
    %241 = arith.mulf %236, %240 : vector<8x16xf32>
    %c6_i32 = arith.constant 6 : i32
    %242 = vector.broadcast %c6_i32 : i32 to vector<8x1xi32>
    %243 = arith.cmpi sgt, %7, %242 : vector<8x1xi32>
    %244 = vector.shape_cast %243 : vector<8x1xi1> to vector<8x1xi1>
    %245 = vector.broadcast %244 : vector<8x1xi1> to vector<8x16xi1>
    %246 = arith.select %245, %241, %212 : vector<8x16xi1>, vector<8x16xf32>
    %247 = arith.select %245, %239, %213 : vector<8x16xi1>, vector<8x16xf32>
    %248 = vector.extract_strided_slice %6 {offsets = [56, 0], sizes = [8, 512], strides = [1, 1]} : vector<64x512xf32> to vector<8x512xf32>
    %cst_37 = arith.constant dense<0.000000e+00> : vector<8x512xf32>
    %249 = tpu.matmul %246, %1, %cst_37 {dimension_numbers = #tpu.dot_dimension_numbers<[1], [0], [0], [1], [0, 0, 1, 1], [], []>} : vector<8x16xf32>, vector<16x512xf32>, vector<8x512xf32> -> vector<8x512xf32>
    %250 = arith.addf %248, %249 : vector<8x512xf32>
    %251 = vector.extract_strided_slice %250 {offsets = [0, 0], sizes = [8, 16], strides = [1, 1]} : vector<8x512xf32> to vector<8x16xf32>
    %252 = arith.negf %251 : vector<8x16xf32>
    %253 = math.exp %252 : vector<8x16xf32>
    %cst_38 = arith.constant 1.000000e+00 : f32
    %254 = vector.broadcast %cst_38 : f32 to vector<8x16xf32>
    %255 = arith.addf %254, %253 : vector<8x16xf32>
    %256 = arith.divf %254, %255 : vector<8x16xf32>
    %257 = vector.extract_strided_slice %250 {offsets = [0, 128], sizes = [8, 16], strides = [1, 1]} : vector<8x512xf32> to vector<8x16xf32>
    %258 = arith.negf %257 : vector<8x16xf32>
    %259 = math.exp %258 : vector<8x16xf32>
    %cst_39 = arith.constant 1.000000e+00 : f32
    %260 = vector.broadcast %cst_39 : f32 to vector<8x16xf32>
    %261 = arith.addf %260, %259 : vector<8x16xf32>
    %262 = arith.divf %260, %261 : vector<8x16xf32>
    %263 = vector.extract_strided_slice %250 {offsets = [0, 256], sizes = [8, 16], strides = [1, 1]} : vector<8x512xf32> to vector<8x16xf32>
    %264 = math.tanh %263 : vector<8x16xf32>
    %265 = vector.extract_strided_slice %250 {offsets = [0, 384], sizes = [8, 16], strides = [1, 1]} : vector<8x512xf32> to vector<8x16xf32>
    %266 = arith.negf %265 : vector<8x16xf32>
    %267 = math.exp %266 : vector<8x16xf32>
    %cst_40 = arith.constant 1.000000e+00 : f32
    %268 = vector.broadcast %cst_40 : f32 to vector<8x16xf32>
    %269 = arith.addf %268, %267 : vector<8x16xf32>
    %270 = arith.divf %268, %269 : vector<8x16xf32>
    %271 = arith.mulf %262, %247 : vector<8x16xf32>
    %272 = arith.mulf %256, %264 : vector<8x16xf32>
    %273 = arith.addf %271, %272 : vector<8x16xf32>
    %274 = math.tanh %273 : vector<8x16xf32>
    %275 = arith.mulf %270, %274 : vector<8x16xf32>
    %c7_i32 = arith.constant 7 : i32
    %276 = vector.broadcast %c7_i32 : i32 to vector<8x1xi32>
    %277 = arith.cmpi sgt, %7, %276 : vector<8x1xi32>
    %278 = vector.shape_cast %277 : vector<8x1xi1> to vector<8x1xi1>
    %279 = vector.broadcast %278 : vector<8x1xi1> to vector<8x16xi1>
    %280 = arith.select %279, %275, %246 : vector<8x16xi1>, vector<8x16xf32>
    %c0_41 = arith.constant 0 : index
    %c0_42 = arith.constant 0 : index
    %281 = vector.load %arg3[%c0_41, %c0_42] : memref<128x128xf32, #tpu.memory_space<vmem>>, vector<16x16xf32>
    %c16 = arith.constant 16 : index
    %c0_43 = arith.constant 0 : index
    %282 = vector.load %arg3[%c16, %c0_43] : memref<128x128xf32, #tpu.memory_space<vmem>>, vector<1x16xf32>
    %c24_44 = arith.constant 24 : index
    %c0_45 = arith.constant 0 : index
    %283 = vector.load %arg3[%c24_44, %c0_45] : memref<128x128xf32, #tpu.memory_space<vmem>>, vector<16x32xf32>
    %c40 = arith.constant 40 : index
    %c0_46 = arith.constant 0 : index
    %284 = vector.load %arg3[%c40, %c0_46] : memref<128x128xf32, #tpu.memory_space<vmem>>, vector<1x32xf32>
    %c48 = arith.constant 48 : index
    %c0_47 = arith.constant 0 : index
    %285 = vector.load %arg3[%c48, %c0_47] : memref<128x128xf32, #tpu.memory_space<vmem>>, vector<32x32xf32>
    %c80 = arith.constant 80 : index
    %c0_48 = arith.constant 0 : index
    %286 = vector.load %arg3[%c80, %c0_48] : memref<128x128xf32, #tpu.memory_space<vmem>>, vector<1x32xf32>
    %c88 = arith.constant 88 : index
    %c0_49 = arith.constant 0 : index
    %287 = vector.load %arg3[%c88, %c0_49] : memref<128x128xf32, #tpu.memory_space<vmem>>, vector<32x128xf32>
    %c120 = arith.constant 120 : index
    %c0_50 = arith.constant 0 : index
    %288 = vector.load %arg3[%c120, %c0_50] : memref<128x128xf32, #tpu.memory_space<vmem>>, vector<1x128xf32>
    %cst_51 = arith.constant dense<0.000000e+00> : vector<8x16xf32>
    %289 = tpu.matmul %280, %281, %cst_51 {dimension_numbers = #tpu.dot_dimension_numbers<[1], [0], [0], [1], [0, 0, 1, 1], [], []>} : vector<8x16xf32>, vector<16x16xf32>, vector<8x16xf32> -> vector<8x16xf32>
    %290 = vector.broadcast %282 : vector<1x16xf32> to vector<8x16xf32>
    %291 = arith.addf %289, %290 : vector<8x16xf32>
    %cst_52 = arith.constant dense<0.000000e+00> : vector<8x32xf32>
    %292 = tpu.matmul %291, %283, %cst_52 {dimension_numbers = #tpu.dot_dimension_numbers<[1], [0], [0], [1], [0, 0, 1, 1], [], []>} : vector<8x16xf32>, vector<16x32xf32>, vector<8x32xf32> -> vector<8x32xf32>
    %293 = vector.broadcast %284 : vector<1x32xf32> to vector<8x32xf32>
    %294 = arith.addf %292, %293 : vector<8x32xf32>
    %295 = math.tanh %294 : vector<8x32xf32>
    %cst_53 = arith.constant dense<0.000000e+00> : vector<8x32xf32>
    %296 = tpu.matmul %295, %285, %cst_53 {dimension_numbers = #tpu.dot_dimension_numbers<[1], [0], [0], [1], [0, 0, 1, 1], [], []>} : vector<8x32xf32>, vector<32x32xf32>, vector<8x32xf32> -> vector<8x32xf32>
    %297 = vector.broadcast %286 : vector<1x32xf32> to vector<8x32xf32>
    %298 = arith.addf %296, %297 : vector<8x32xf32>
    %299 = math.tanh %298 : vector<8x32xf32>
    %cst_54 = arith.constant dense<0.000000e+00> : vector<8x128xf32>
    %300 = tpu.matmul %299, %287, %cst_54 {dimension_numbers = #tpu.dot_dimension_numbers<[1], [0], [0], [1], [0, 0, 1, 1], [], []>} : vector<8x32xf32>, vector<32x128xf32>, vector<8x128xf32> -> vector<8x128xf32>
    %301 = vector.broadcast %288 : vector<1x128xf32> to vector<8x128xf32>
    %302 = arith.addf %300, %301 : vector<8x128xf32>
    %c0_55 = arith.constant 0 : index
    %c0_56 = arith.constant 0 : index
    %303 = vector.load %arg4[%c0_55, %c0_56] : memref<8x128xf32, #tpu.memory_space<vmem>>, vector<8x128xf32>
    tpu.vector_store %arg4[%c0_55, %c0_56], %302 {strides = array<i32>} : memref<8x128xf32, #tpu.memory_space<vmem>>, vector<8x128xf32>,
    return
  }
}

</mosaic_0001>

<llo_original>
// kernel: _lambda_.1
$region0: #{_lambda_.1}
  #allocation0 [shape = 'u32[]', space=smem, size = 0x4, offset = 0x4, fixed_abs, tag = 'smem constant byte address 0x4 - core index']
  #allocation1 [shape = 'u32[144,128]{1,0:T(1,128)}', space=vmem, size = 0x12000, scoped, tag = 'internal scratch']
  %s0 = inlined_call_operand.vmem [shape: f32[64,8], index: 0, kind: input, shape index: {}]
  %s1 = inlined_call_operand.vmem [shape: s32[8,1], index: 1, kind: input, shape index: {}]
  %s2 = inlined_call_operand.hbm [shape: f32[32,512], index: 2, kind: input, shape index: {}]
  %s3 = inlined_call_operand.hbm [shape: f32[128,128], index: 3, kind: input, shape index: {}]
  %s4 = inlined_call_operand.vmem [shape: f32[8,128], index: 4, kind: output, shape index: {}]
  %s5 = sld [smem:[#allocation0]]
  $region34: #{_lambda_.1} parent=0
    _
  %s7 = ssub.s32 1, %s5
  %s8 = scalar_select 0, %s7, %s5
  $region1: #{_lambda_.1} parent=0
    #allocation2 [shape = 'u8[65536]{0}', space=vmem, size = 0x10000, scoped, tag = 'input window, operand 2, single buffered']
    #allocation3 [shape = 's32[1]{0}', space=sflag, size = 0x4, scoped, tag = 'scoped memory for _lambda_.1']
    #allocation4 [shape = 'u8[65536]{0}', space=vmem, size = 0x10000, scoped, tag = 'input window, operand 3, single buffered']
    #allocation5 [shape = 's32[1]{0}', space=sflag, size = 0x4, scoped, tag = 'scoped memory for _lambda_.1']
    %9 = vsyncpa [#allocation3], 0
    %10 = vsyncpa [#allocation5], 0
    // Predicated region
    $region2: #{_lambda_.1} parent=1 // pred_check
      _
    $region3: #{_lambda_.1} parent=1 // pred_check_branch
      %12 = sbr.rel (0) target = $region5
    $region4: #{_lambda_.1} parent=1 // pred_region
      _
    $region5: #{_lambda_.1} parent=1 // pred_fallthru
      _
    // Predicated region
    $region6: #{_lambda_.1} parent=1 // pred_check
      _
    $region7: #{_lambda_.1} parent=1 // pred_check_branch
      %14 = sbr.rel (0) target = $region9
    $region8: #{_lambda_.1} parent=1 // pred_region
      _
    $region9: #{_lambda_.1} parent=1 // pred_fallthru
      _
    // Predicated region
    $region10: #{_lambda_.1} parent=1 // pred_check
      _
    $region11: #{_lambda_.1} parent=1 // pred_check_branch
      %16 = sbr.rel (0) target = $region13
    $region12: #{_lambda_.1} parent=1 // pred_region
      %s18 = ssub.s32 2048, 2048
      %19 = vsyncadd [#allocation3], %s18
      %s20 = sshll.u32 [#allocation2], 4
      %s21 = int_to_ptr.vmem [resolvable:$true] %s20
      %26 = dma.hbm_to_vmem [thread:$0]  %s2, 2048, %s21, [#allocation3], 512, 512, 32
    $region13: #{_lambda_.1} parent=1 // pred_fallthru
      _
    // Predicated region
    $region14: #{_lambda_.1} parent=1 // pred_check
      _
    $region15: #{_lambda_.1} parent=1 // pred_check_branch
      %28 = sbr.rel (0) target = $region17
    $region16: #{_lambda_.1} parent=1 // pred_region
      %s30 = ssub.s32 2048, 2048
      %31 = vsyncadd [#allocation5], %s30
      %s32 = sshll.u32 [#allocation4], 4
      %s33 = int_to_ptr.vmem [resolvable:$true] %s32
      %38 = dma.hbm_to_vmem [thread:$0]  %s3, 2048, %s33, [#allocation5], 128, 128, 8
    $region17: #{_lambda_.1} parent=1 // pred_fallthru
      _
    // Predicated region
    $region18: #{_lambda_.1} parent=1 // pred_check
      _
    $region19: #{_lambda_.1} parent=1 // pred_check_branch
      %40 = sbr.rel (0) target = $region21
    $region20: #{_lambda_.1} parent=1 // pred_region
      %41 = dma.done [#allocation3], 2048
    $region21: #{_lambda_.1} parent=1 // pred_fallthru
      _
    // Predicated region
    $region22: #{_lambda_.1} parent=1 // pred_check
      _
    $region23: #{_lambda_.1} parent=1 // pred_check_branch
      %43 = sbr.rel (0) target = $region25
    $region24: #{_lambda_.1} parent=1 // pred_region
      %44 = dma.done [#allocation5], 2048
    $region25: #{_lambda_.1} parent=1 // pred_fallthru
      _
    %v45 = vld [vmem:[#allocation2] sm:$0xff]
    %v46 = vld [vmem:[#allocation2 + $0x8] sm:$0xff]
    %v47 = vld [vmem:[#allocation2 + $0x10] sm:$0xff]
    %v48 = vld [vmem:[#allocation2 + $0x18] sm:$0xff]
    %v49 = vld [vmem:[#allocation2 + $0x20] sm:$0xff]
    %v50 = vld [vmem:[#allocation2 + $0x28] sm:$0xff]
    %v51 = vld [vmem:[#allocation2 + $0x30] sm:$0xff]
    %v52 = vld [vmem:[#allocation2 + $0x38] sm:$0xff]
    %v53 = vld [vmem:[#allocation2 + $0x40] sm:$0xff]
    %v54 = vld [vmem:[#allocation2 + $0x48] sm:$0xff]
    %v55 = vld [vmem:[#allocation2 + $0x50] sm:$0xff]
    %v56 = vld [vmem:[#allocation2 + $0x58] sm:$0xff]
    %s57 = scalar_lea.vmem [#allocation2], 96
    %v58 = vld [vmem:[%s57] ss:$8 sm:$0xf]
    %v59 = vld [vmem:[%s0] sm:$0xff]
    %v60 = vld [vmem:[%s0 + $0x8] sm:$0xff]
    %v61 = vld [vmem:[%s0 + $0x10] sm:$0xff]
    %v62 = vld [vmem:[%s0 + $0x18] sm:$0xff]
    %v63 = vld [vmem:[%s0 + $0x20] sm:$0xff]
    %v64 = vld [vmem:[%s0 + $0x28] sm:$0xff]
    %v65 = vld [vmem:[%s0 + $0x30] sm:$0xff]
    %v66 = vld [vmem:[%s0 + $0x38] sm:$0xff]
    %v68 = vlaneseq
    %v69 = vshrl.u32 %v68, 7
    %v70 = vsub.s32 0, %v69
    %v71 = vrot.slane %v58, %v70
    %v72 = vlaneseq
    %v73 = vshrl.u32 %v72, 7
    %v74 = vsub.s32 1, %v73
    %v75 = vrot.slane %v58, %v74
    %v76 = vlaneseq
    %v77 = vshrl.u32 %v76, 7
    %v78 = vsub.s32 2, %v77
    %v79 = vrot.slane %v58, %v78
    %v80 = vlaneseq
    %v81 = vshrl.u32 %v80, 7
    %v82 = vsub.s32 3, %v81
    %v83 = vrot.slane %v58, %v82
    %vm88 = vcmask 64512
    %v90 = vsel %vm88, %v59, 0
    %v93 = vsel %vm88, %v60, 0
    %v96 = vsel %vm88, %v61, 0
    %v99 = vsel %vm88, %v62, 0
    %v102 = vsel %vm88, %v63, 0
    %v105 = vsel %vm88, %v64, 0
    %v108 = vsel %vm88, %v65, 0
    %v111 = vsel %vm88, %v66, 0
    %113 = vmatprep.subr.mxu0 %v46
    %114 = vmatpush1.msra.mxu0 %v45
    %115 = vmatprep.subr.mxu0 0.0
    %116 = vmatpush1.msra.mxu0 0.0
    %117 = vmatprep.subr.mxu0 0.0
    %118 = vmatpush1.msra.mxu0 0.0
    %119 = vmatprep.subr.mxu0 0.0
    %120 = vmatpush1.msra.mxu0 0.0
    %121 = vmatprep.subr.mxu0 0.0
    %122 = vmatpush1.msra.mxu0 0.0
    %123 = vmatprep.subr.mxu0 0.0
    %124 = vmatpush1.msra.mxu0 0.0
    %125 = vmatprep.subr.mxu0 0.0
    %126 = vmatpush1.msra.mxu0 0.0
    %127 = vmatprep.subr.mxu0 0.0
    %128 = vmatpush1.msra.mxu0 0.0
    %129 = vmatprep.subr.mxu0 0.0
    %130 = vmatpush1.msra.mxu0 0.0
    %131 = vmatprep.subr.mxu0 0.0
    %132 = vmatpush1.msra.mxu0 0.0
    %133 = vmatprep.subr.mxu0 0.0
    %134 = vmatpush1.msra.mxu0 0.0
    %135 = vmatprep.subr.mxu0 0.0
    %136 = vmatpush1.msra.mxu0 0.0
    %137 = vmatprep.subr.mxu0 0.0
    %138 = vmatpush1.msra.mxu0 0.0
    %139 = vmatprep.subr.mxu0 0.0
    %140 = vmatpush1.msra.mxu0 0.0
    %141 = vmatprep.subr.mxu0 0.0
    %142 = vmatpush1.msra.mxu0 0.0
    %143 = vmatprep.subr.mxu0 0.0
    %144 = vmatpush1.msra.mxu0 0.0
    %145 = vmatprep.subr.mxu0 0.0
    %146 = vmatpush1.msra.mxu0 0.0
    %147 = vmatprep.subr.mxu0 0.0
    %148 = vmatpush1.msra.mxu0 0.0
    %149 = vmatprep.subr.mxu0 0.0
    %150 = vmatpush1.msra.mxu0 0.0
    %151 = vmatprep.subr.mxu0 0.0
    %152 = vmatpush1.msra.mxu0 0.0
    %153 = vmatprep.subr.mxu0 0.0
    %154 = vmatpush1.msra.mxu0 0.0
    %155 = vmatprep.subr.mxu0 0.0
    %156 = vmatpush1.msra.mxu0 0.0
    %157 = vmatprep.subr.mxu0 0.0
    %158 = vmatpush1.msra.mxu0 0.0
    %159 = vmatprep.subr.mxu0 0.0
    %160 = vmatpush1.msra.mxu0 0.0
    %161 = vmatprep.subr.mxu0 0.0
    %162 = vmatpush1.msra.mxu0 0.0
    %163 = vmatprep.subr.mxu0 0.0
    %164 = vmatpush1.msra.mxu0 0.0
    %165 = vmatprep.subr.mxu0 0.0
    %166 = vmatpush1.msra.mxu0 0.0
    %167 = vmatprep.subr.mxu0 0.0
    %168 = vmatpush1.msra.mxu0 0.0
    %169 = vmatprep.subr.mxu0 0.0
    %170 = vmatpush1.msra.mxu0 0.0
    %171 = vmatprep.subr.mxu0 0.0
    %172 = vmatpush1.msra.mxu0 0.0
    %173 = vmatprep.subr.mxu0 0.0
    %174 = vmatpush1.msra.mxu0 0.0
    %175 = vmatprep.subr.mxu0 0.0
    %176 = vmatpush1.msra.mxu0 0.0
    %177 = vmatprep.mubr.f32.mxu0 0.0
    %178 = vmatmul.mubr.f32.gmra.mrb[0].mxu0 %v90
    %v179 = vpop.f32.mrb[0].mxu0
    %v180 = vadd.f32 %v71, %v179
    %v181 = vpop.f32.mrb[0].mxu0
    %v182 = vadd.f32 %v75, %v181
    %183 = vmatprep.mubr.f32.mxu0 0.0
    %184 = vmatmul.mubr.f32.gmra.mrb[0].mxu0 %v93
    %v185 = vpop.f32.mrb[0].mxu0
    %v186 = vadd.f32 %v71, %v185
    %v187 = vpop.f32.mrb[0].mxu0
    %v188 = vadd.f32 %v75, %v187
    %189 = vmatprep.mubr.f32.mxu0 0.0
    %190 = vmatmul.mubr.f32.gmra.mrb[0].mxu0 %v96
    %v191 = vpop.f32.mrb[0].mxu0
    %v192 = vadd.f32 %v71, %v191
    %v193 = vpop.f32.mrb[0].mxu0
    %v194 = vadd.f32 %v75, %v193
    %195 = vmatprep.mubr.f32.mxu0 0.0
    %196 = vmatmul.mubr.f32.gmra.mrb[0].mxu0 %v99
    %v197 = vpop.f32.mrb[0].mxu0
    %v198 = vadd.f32 %v71, %v197
    %v199 = vpop.f32.mrb[0].mxu0
    %v200 = vadd.f32 %v75, %v199
    %201 = vmatprep.mubr.f32.mxu0 0.0
    %202 = vmatmul.mubr.f32.gmra.mrb[0].mxu0 %v102
    %v203 = vpop.f32.mrb[0].mxu0
    %v204 = vadd.f32 %v71, %v203
    %v205 = vpop.f32.mrb[0].mxu0
    %v206 = vadd.f32 %v75, %v205
    %207 = vmatprep.mubr.f32.mxu0 0.0
    %208 = vmatmul.mubr.f32.gmra.mrb[0].mxu0 %v105
    %v209 = vpop.f32.mrb[0].mxu0
    %v210 = vadd.f32 %v71, %v209
    %v211 = vpop.f32.mrb[0].mxu0
    %v212 = vadd.f32 %v75, %v211
    %213 = vmatprep.mubr.f32.mxu0 0.0
    %214 = vmatmul.mubr.f32.gmra.mrb[0].mxu0 %v108
    %v215 = vpop.f32.mrb[0].mxu0
    %v216 = vadd.f32 %v71, %v215
    %v217 = vpop.f32.mrb[0].mxu0
    %v218 = vadd.f32 %v75, %v217
    %219 = vmatprep.mubr.f32.mxu0 0.0
    %220 = vmatmul.mubr.f32.gmra.mrb[0].mxu0 %v111
    %v221 = vpop.f32.mrb[0].mxu0
    %v222 = vadd.f32 %v71, %v221
    %v223 = vpop.f32.mrb[0].mxu0
    %v224 = vadd.f32 %v75, %v223
    %225 = vdwg.mxu0
    %226 = vmatprep.subr.mxu0 %v48
    %227 = vmatpush1.msra.mxu0 %v47
    %228 = vmatprep.subr.mxu0 0.0
    %229 = vmatpush1.msra.mxu0 0.0
    %230 = vmatprep.subr.mxu0 0.0
    %231 = vmatpush1.msra.mxu0 0.0
    %232 = vmatprep.subr.mxu0 0.0
    %233 = vmatpush1.msra.mxu0 0.0
    %234 = vmatprep.subr.mxu0 0.0
    %235 = vmatpush1.msra.mxu0 0.0
    %236 = vmatprep.subr.mxu0 0.0
    %237 = vmatpush1.msra.mxu0 0.0
    %238 = vmatprep.subr.mxu0 0.0
    %239 = vmatpush1.msra.mxu0 0.0
    %240 = vmatprep.subr.mxu0 0.0
    %241 = vmatpush1.msra.mxu0 0.0
    %242 = vmatprep.subr.mxu0 0.0
    %243 = vmatpush1.msra.mxu0 0.0
    %244 = vmatprep.subr.mxu0 0.0
    %245 = vmatpush1.msra.mxu0 0.0
    %246 = vmatprep.subr.mxu0 0.0
    %247 = vmatpush1.msra.mxu0 0.0
    %248 = vmatprep.subr.mxu0 0.0
    %249 = vmatpush1.msra.mxu0 0.0
    %250 = vmatprep.subr.mxu0 0.0
    %251 = vmatpush1.msra.mxu0 0.0
    %252 = vmatprep.subr.mxu0 0.0
    %253 = vmatpush1.msra.mxu0 0.0
    %254 = vmatprep.subr.mxu0 0.0
    %255 = vmatpush1.msra.mxu0 0.0
    %256 = vmatprep.subr.mxu0 0.0
    %257 = vmatpush1.msra.mxu0 0.0
    %258 = vmatprep.subr.mxu0 0.0
    %259 = vmatpush1.msra.mxu0 0.0
    %260 = vmatprep.subr.mxu0 0.0
    %261 = vmatpush1.msra.mxu0 0.0
    %262 = vmatprep.subr.mxu0 0.0
    %263 = vmatpush1.msra.mxu0 0.0
    %264 = vmatprep.subr.mxu0 0.0
    %265 = vmatpush1.msra.mxu0 0.0
    %266 = vmatprep.subr.mxu0 0.0
    %267 = vmatpush1.msra.mxu0 0.0
    %268 = vmatprep.subr.mxu0 0.0
    %269 = vmatpush1.msra.mxu0 0.0
    %270 = vmatprep.subr.mxu0 0.0
    %271 = vmatpush1.msra.mxu0 0.0
    %272 = vmatprep.subr.mxu0 0.0
    %273 = vmatpush1.msra.mxu0 0.0
    %274 = vmatprep.subr.mxu0 0.0
    %275 = vmatpush1.msra.mxu0 0.0
    %276 = vmatprep.subr.mxu0 0.0
    %277 = vmatpush1.msra.mxu0 0.0
    %278 = vmatprep.subr.mxu0 0.0
    %279 = vmatpush1.msra.mxu0 0.0
    %280 = vmatprep.subr.mxu0 0.0
    %281 = vmatpush1.msra.mxu0 0.0
    %282 = vmatprep.subr.mxu0 0.0
    %283 = vmatpush1.msra.mxu0 0.0
    %284 = vmatprep.subr.mxu0 0.0
    %285 = vmatpush1.msra.mxu0 0.0
    %286 = vmatprep.subr.mxu0 0.0
    %287 = vmatpush1.msra.mxu0 0.0
    %288 = vmatprep.subr.mxu0 0.0
    %289 = vmatpush1.msra.mxu0 0.0
    %290 = vmatprep.mubr.f32.mxu0 0.0
    %291 = vmatmul.mubr.f32.gmra.mrb[0].mxu0 %v90
    %v292 = vpop.f32.mrb[0].mxu0
    %v293 = vadd.f32 %v79, %v292
    %v294 = vpop.f32.mrb[0].mxu0
    %v295 = vadd.f32 %v83, %v294
    %296 = vmatprep.mubr.f32.mxu0 0.0
    %297 = vmatmul.mubr.f32.gmra.mrb[0].mxu0 %v93
    %v298 = vpop.f32.mrb[0].mxu0
    %v299 = vadd.f32 %v79, %v298
    %v300 = vpop.f32.mrb[0].mxu0
    %v301 = vadd.f32 %v83, %v300
    %302 = vmatprep.mubr.f32.mxu0 0.0
    %303 = vmatmul.mubr.f32.gmra.mrb[0].mxu0 %v96
    %v304 = vpop.f32.mrb[0].mxu0
    %v305 = vadd.f32 %v79, %v304
    %v306 = vpop.f32.mrb[0].mxu0
    %v307 = vadd.f32 %v83, %v306
    %308 = vmatprep.mubr.f32.mxu0 0.0
    %309 = vmatmul.mubr.f32.gmra.mrb[0].mxu0 %v99
    %v310 = vpop.f32.mrb[0].mxu0
    %v311 = vadd.f32 %v79, %v310
    %v312 = vpop.f32.mrb[0].mxu0
    %v313 = vadd.f32 %v83, %v312
    %314 = vmatprep.mubr.f32.mxu0 0.0
    %315 = vmatmul.mubr.f32.gmra.mrb[0].mxu0 %v102
    %v316 = vpop.f32.mrb[0].mxu0
    %v317 = vadd.f32 %v79, %v316
    %v318 = vpop.f32.mrb[0].mxu0
    %v319 = vadd.f32 %v83, %v318
    %320 = vmatprep.mubr.f32.mxu0 0.0
    %321 = vmatmul.mubr.f32.gmra.mrb[0].mxu0 %v105
    %v322 = vpop.f32.mrb[0].mxu0
    %v323 = vadd.f32 %v79, %v322
    %v324 = vpop.f32.mrb[0].mxu0
    %v325 = vadd.f32 %v83, %v324
    %326 = vmatprep.mubr.f32.mxu0 0.0
    %327 = vmatmul.mubr.f32.gmra.mrb[0].mxu0 %v108
    %v328 = vpop.f32.mrb[0].mxu0
    %v329 = vadd.f32 %v79, %v328
    %v330 = vpop.f32.mrb[0].mxu0
    %v331 = vadd.f32 %v83, %v330
    %332 = vmatprep.mubr.f32.mxu0 0.0
    %333 = vmatmul.mubr.f32.gmra.mrb[0].mxu0 %v111
    %v334 = vpop.f32.mrb[0].mxu0
    %v335 = vadd.f32 %v79, %v334
    %v336 = vpop.f32.mrb[0].mxu0
    %v337 = vadd.f32 %v83, %v336
    %338 = vdwg.mxu0
    %v339 = vld [vmem:[%s1] sm:$0xff]
    %vm340 = vcmask 130048
    %v342 = vsel %vm340, 0.0, 0
    %344 = vmatprep.subr.mxu0 %v50
    %345 = vmatpush1.msra.mxu0 %v49
    %346 = vmatprep.subr.mxu0 %v54
    %347 = vmatpush1.msra.mxu0 %v53
    %348 = vmatprep.subr.mxu0 0.0
    %349 = vmatpush1.msra.mxu0 0.0
    %350 = vmatprep.subr.mxu0 0.0
    %351 = vmatpush1.msra.mxu0 0.0
    %352 = vmatprep.subr.mxu0 0.0
    %353 = vmatpush1.msra.mxu0 0.0
    %354 = vmatprep.subr.mxu0 0.0
    %355 = vmatpush1.msra.mxu0 0.0
    %356 = vmatprep.subr.mxu0 0.0
    %357 = vmatpush1.msra.mxu0 0.0
    %358 = vmatprep.subr.mxu0 0.0
    %359 = vmatpush1.msra.mxu0 0.0
    %360 = vmatprep.subr.mxu0 0.0
    %361 = vmatpush1.msra.mxu0 0.0
    %362 = vmatprep.subr.mxu0 0.0
    %363 = vmatpush1.msra.mxu0 0.0
    %364 = vmatprep.subr.mxu0 0.0
    %365 = vmatpush1.msra.mxu0 0.0
    %366 = vmatprep.subr.mxu0 0.0
    %367 = vmatpush1.msra.mxu0 0.0
    %368 = vmatprep.subr.mxu0 0.0
    %369 = vmatpush1.msra.mxu0 0.0
    %370 = vmatprep.subr.mxu0 0.0
    %371 = vmatpush1.msra.mxu0 0.0
    %372 = vmatprep.subr.mxu0 0.0
    %373 = vmatpush1.msra.mxu0 0.0
    %374 = vmatprep.subr.mxu0 0.0
    %375 = vmatpush1.msra.mxu0 0.0
    %376 = vmatprep.subr.mxu0 0.0
    %377 = vmatpush1.msra.mxu0 0.0
    %378 = vmatprep.subr.mxu0 0.0
    %379 = vmatpush1.msra.mxu0 0.0
    %380 = vmatprep.subr.mxu0 0.0
    %381 = vmatpush1.msra.mxu0 0.0
    %382 = vmatprep.subr.mxu0 0.0
    %383 = vmatpush1.msra.mxu0 0.0
    %384 = vmatprep.subr.mxu0 0.0
    %385 = vmatpush1.msra.mxu0 0.0
    %386 = vmatprep.subr.mxu0 0.0
    %387 = vmatpush1.msra.mxu0 0.0
    %388 = vmatprep.subr.mxu0 0.0
    %389 = vmatpush1.msra.mxu0 0.0
    %390 = vmatprep.subr.mxu0 0.0
    %391 = vmatpush1.msra.mxu0 0.0
    %392 = vmatprep.subr.mxu0 0.0
    %393 = vmatpush1.msra.mxu0 0.0
    %394 = vmatprep.subr.mxu0 0.0
    %395 = vmatpush1.msra.mxu0 0.0
    %396 = vmatprep.subr.mxu0 0.0
    %397 = vmatpush1.msra.mxu0 0.0
    %398 = vmatprep.subr.mxu0 0.0
    %399 = vmatpush1.msra.mxu0 0.0
    %400 = vmatprep.subr.mxu0 0.0
    %401 = vmatpush1.msra.mxu0 0.0
    %402 = vmatprep.subr.mxu0 0.0
    %403 = vmatpush1.msra.mxu0 0.0
    %404 = vmatprep.subr.mxu0 0.0
    %405 = vmatpush1.msra.mxu0 0.0
    %406 = vmatprep.subr.mxu0 0.0
    %407 = vmatpush1.msra.mxu0 0.0
    %408 = vmatprep.mubr.f32.mxu0 0.0
    %409 = vmatmul.mubr.f32.gmra.mrb[0].mxu0 %v342
    %v410 = vpop.f32.mrb[0].mxu0
    %v411 = vadd.f32 0.0, %v410
    %v412 = vpop.f32.mrb[0].mxu0
    %v413 = vadd.f32 0.0, %v412
    %414 = vdwg.mxu0
    %415 = vmatprep.subr.mxu0 %v52
    %416 = vmatpush1.msra.mxu0 %v51
    %417 = vmatprep.subr.mxu0 %v56
    %418 = vmatpush1.msra.mxu0 %v55
    %419 = vmatprep.subr.mxu0 0.0
    %420 = vmatpush1.msra.mxu0 0.0
    %421 = vmatprep.subr.mxu0 0.0
    %422 = vmatpush1.msra.mxu0 0.0
    %423 = vmatprep.subr.mxu0 0.0
    %424 = vmatpush1.msra.mxu0 0.0
    %425 = vmatprep.subr.mxu0 0.0
    %426 = vmatpush1.msra.mxu0 0.0
    %427 = vmatprep.subr.mxu0 0.0
    %428 = vmatpush1.msra.mxu0 0.0
    %429 = vmatprep.subr.mxu0 0.0
    %430 = vmatpush1.msra.mxu0 0.0
    %431 = vmatprep.subr.mxu0 0.0
    %432 = vmatpush1.msra.mxu0 0.0
    %433 = vmatprep.subr.mxu0 0.0
    %434 = vmatpush1.msra.mxu0 0.0
    %435 = vmatprep.subr.mxu0 0.0
    %436 = vmatpush1.msra.mxu0 0.0
    %437 = vmatprep.subr.mxu0 0.0
    %438 = vmatpush1.msra.mxu0 0.0
    %439 = vmatprep.subr.mxu0 0.0
    %440 = vmatpush1.msra.mxu0 0.0
    %441 = vmatprep.subr.mxu0 0.0
    %442 = vmatpush1.msra.mxu0 0.0
    %443 = vmatprep.subr.mxu0 0.0
    %444 = vmatpush1.msra.mxu0 0.0
    %445 = vmatprep.subr.mxu0 0.0
    %446 = vmatpush1.msra.mxu0 0.0
    %447 = vmatprep.subr.mxu0 0.0
    %448 = vmatpush1.msra.mxu0 0.0
    %449 = vmatprep.subr.mxu0 0.0
    %450 = vmatpush1.msra.mxu0 0.0
    %451 = vmatprep.subr.mxu0 0.0
    %452 = vmatpush1.msra.mxu0 0.0
    %453 = vmatprep.subr.mxu0 0.0
    %454 = vmatpush1.msra.mxu0 0.0
    %455 = vmatprep.subr.mxu0 0.0
    %456 = vmatpush1.msra.mxu0 0.0
    %457 = vmatprep.subr.mxu0 0.0
    %458 = vmatpush1.msra.mxu0 0.0
    %459 = vmatprep.subr.mxu0 0.0
    %460 = vmatpush1.msra.mxu0 0.0
    %461 = vmatprep.subr.mxu0 0.0
    %462 = vmatpush1.msra.mxu0 0.0
    %463 = vmatprep.subr.mxu0 0.0
    %464 = vmatpush1.msra.mxu0 0.0
    %465 = vmatprep.subr.mxu0 0.0
    %466 = vmatpush1.msra.mxu0 0.0
    %467 = vmatprep.subr.mxu0 0.0
    %468 = vmatpush1.msra.mxu0 0.0
    %469 = vmatprep.subr.mxu0 0.0
    %470 = vmatpush1.msra.mxu0 0.0
    %471 = vmatprep.subr.mxu0 0.0
    %472 = vmatpush1.msra.mxu0 0.0
    %473 = vmatprep.subr.mxu0 0.0
    %474 = vmatpush1.msra.mxu0 0.0
    %475 = vmatprep.subr.mxu0 0.0
    %476 = vmatpush1.msra.mxu0 0.0
    %477 = vmatprep.subr.mxu0 0.0
    %478 = vmatpush1.msra.mxu0 0.0
    %479 = vmatprep.mubr.f32.mxu0 0.0
    %480 = vmatmul.mubr.f32.gmra.mrb[0].mxu0 %v342
    %v481 = vpop.f32.mrb[0].mxu0
    %v482 = vadd.f32 0.0, %v481
    %v483 = vpop.f32.mrb[0].mxu0
    %v484 = vadd.f32 0.0, %v483
    %485 = vdwg.mxu0
    %v486 = vadd.f32 %v180, %v411
    %v487 = vadd.f32 %v182, %v413
    %v488 = vadd.f32 %v293, %v482
    %v489 = vadd.f32 %v295, %v484
    %v490 = vxor.u32 %v486, 2147483648
    %v491 = vmul.f32 %v490, 1.442695
    %v492 = vpow.pop %v491
    %v493 = vadd.f32 %v492, 1.0
    %v494 = vrcp.pop %v493
    %v495 = vmul.f32 1.0, %v494
    %v496 = vxor.u32 %v487, 2147483648
    %v497 = vmul.f32 %v496, 1.442695
    %v498 = vpow.pop %v497
    %v499 = vadd.f32 %v498, 1.0
    %v500 = vrcp.pop %v499
    %v501 = vmul.f32 1.0, %v500
    %v502 = vtanh.pop %v488
    %v503 = vxor.u32 %v489, 2147483648
    %v504 = vmul.f32 %v503, 1.442695
    %v505 = vpow.pop %v504
    %v506 = vadd.f32 %v505, 1.0
    %v507 = vrcp.pop %v506
    %v508 = vmul.f32 1.0, %v507
    %v509 = vmul.f32 %v501, 0.0
    %v510 = vmul.f32 %v495, %v502
    %v511 = vadd.f32 %v509, %v510
    %v512 = vtanh.pop %v511
    %v513 = vmul.f32 %v508, %v512
    %vm514 = vcmp.gt.s32.totalorder %v339, 0
    %v515 = vsel %vm514, 1, 0
    %516 = vset.pattern.permute.xlu0 0
    %517 = vperm.xlu0 %516, %v515
    %v518 = vpop.permute.xlu0 %517
    %vm519 = vcmp.eq.s32.totalorder %v518, 1
    %v520 = vsel %vm519, %v513, 0.0
    %v521 = vsel %vm519, %v511, 0.0
    %v523 = vsel %vm340, %v520, 0
    %525 = vmatprep.subr.mxu0 %v50
    %526 = vmatpush1.msra.mxu0 %v49
    %527 = vmatprep.subr.mxu0 %v54
    %528 = vmatpush1.msra.mxu0 %v53
    %529 = vmatprep.subr.mxu0 0.0
    %530 = vmatpush1.msra.mxu0 0.0
    %531 = vmatprep.subr.mxu0 0.0
    %532 = vmatpush1.msra.mxu0 0.0
    %533 = vmatprep.subr.mxu0 0.0
    %534 = vmatpush1.msra.mxu0 0.0
    %535 = vmatprep.subr.mxu0 0.0
    %536 = vmatpush1.msra.mxu0 0.0
    %537 = vmatprep.subr.mxu0 0.0
    %538 = vmatpush1.msra.mxu0 0.0
    %539 = vmatprep.subr.mxu0 0.0
    %540 = vmatpush1.msra.mxu0 0.0
    %541 = vmatprep.subr.mxu0 0.0
    %542 = vmatpush1.msra.mxu0 0.0
    %543 = vmatprep.subr.mxu0 0.0
    %544 = vmatpush1.msra.mxu0 0.0
    %545 = vmatprep.subr.mxu0 0.0
    %546 = vmatpush1.msra.mxu0 0.0
    %547 = vmatprep.subr.mxu0 0.0
    %548 = vmatpush1.msra.mxu0 0.0
    %549 = vmatprep.subr.mxu0 0.0
    %550 = vmatpush1.msra.mxu0 0.0
    %551 = vmatprep.subr.mxu0 0.0
    %552 = vmatpush1.msra.mxu0 0.0
    %553 = vmatprep.subr.mxu0 0.0
    %554 = vmatpush1.msra.mxu0 0.0
    %555 = vmatprep.subr.mxu0 0.0
    %556 = vmatpush1.msra.mxu0 0.0
    %557 = vmatprep.subr.mxu0 0.0
    %558 = vmatpush1.msra.mxu0 0.0
    %559 = vmatprep.subr.mxu0 0.0
    %560 = vmatpush1.msra.mxu0 0.0
    %561 = vmatprep.subr.mxu0 0.0
    %562 = vmatpush1.msra.mxu0 0.0
    %563 = vmatprep.subr.mxu0 0.0
    %564 = vmatpush1.msra.mxu0 0.0
    %565 = vmatprep.subr.mxu0 0.0
    %566 = vmatpush1.msra.mxu0 0.0
    %567 = vmatprep.subr.mxu0 0.0
    %568 = vmatpush1.msra.mxu0 0.0
    %569 = vmatprep.subr.mxu0 0.0
    %570 = vmatpush1.msra.mxu0 0.0
    %571 = vmatprep.subr.mxu0 0.0
    %572 = vmatpush1.msra.mxu0 0.0
    %573 = vmatprep.subr.mxu0 0.0
    %574 = vmatpush1.msra.mxu0 0.0
    %575 = vmatprep.subr.mxu0 0.0
    %576 = vmatpush1.msra.mxu0 0.0
    %577 = vmatprep.subr.mxu0 0.0
    %578 = vmatpush1.msra.mxu0 0.0
    %579 = vmatprep.subr.mxu0 0.0
    %580 = vmatpush1.msra.mxu0 0.0
    %581 = vmatprep.subr.mxu0 0.0
    %582 = vmatpush1.msra.mxu0 0.0
    %583 = vmatprep.subr.mxu0 0.0
    %584 = vmatpush1.msra.mxu0 0.0
    %585 = vmatprep.subr.mxu0 0.0
    %586 = vmatpush1.msra.mxu0 0.0
    %587 = vmatprep.subr.mxu0 0.0
    %588 = vmatpush1.msra.mxu0 0.0
    %589 = vmatprep.mubr.f32.mxu0 0.0
    %590 = vmatmul.mubr.f32.gmra.mrb[0].mxu0 %v523
    %v591 = vpop.f32.mrb[0].mxu0
    %v592 = vadd.f32 0.0, %v591
    %v593 = vpop.f32.mrb[0].mxu0
    %v594 = vadd.f32 0.0, %v593
    %595 = vdwg.mxu0
    %596 = vmatprep.subr.mxu0 %v52
    %597 = vmatpush1.msra.mxu0 %v51
    %598 = vmatprep.subr.mxu0 %v56
    %599 = vmatpush1.msra.mxu0 %v55
    %600 = vmatprep.subr.mxu0 0.0
    %601 = vmatpush1.msra.mxu0 0.0
    %602 = vmatprep.subr.mxu0 0.0
    %603 = vmatpush1.msra.mxu0 0.0
    %604 = vmatprep.subr.mxu0 0.0
    %605 = vmatpush1.msra.mxu0 0.0
    %606 = vmatprep.subr.mxu0 0.0
    %607 = vmatpush1.msra.mxu0 0.0
    %608 = vmatprep.subr.mxu0 0.0
    %609 = vmatpush1.msra.mxu0 0.0
    %610 = vmatprep.subr.mxu0 0.0
    %611 = vmatpush1.msra.mxu0 0.0
    %612 = vmatprep.subr.mxu0 0.0
    %613 = vmatpush1.msra.mxu0 0.0
    %614 = vmatprep.subr.mxu0 0.0
    %615 = vmatpush1.msra.mxu0 0.0
    %616 = vmatprep.subr.mxu0 0.0
    %617 = vmatpush1.msra.mxu0 0.0
    %618 = vmatprep.subr.mxu0 0.0
    %619 = vmatpush1.msra.mxu0 0.0
    %620 = vmatprep.subr.mxu0 0.0
    %621 = vmatpush1.msra.mxu0 0.0
    %622 = vmatprep.subr.mxu0 0.0
    %623 = vmatpush1.msra.mxu0 0.0
    %624 = vmatprep.subr.mxu0 0.0
    %625 = vmatpush1.msra.mxu0 0.0
    %626 = vmatprep.subr.mxu0 0.0
    %627 = vmatpush1.msra.mxu0 0.0
    %628 = vmatprep.subr.mxu0 0.0
    %629 = vmatpush1.msra.mxu0 0.0
    %630 = vmatprep.subr.mxu0 0.0
    %631 = vmatpush1.msra.mxu0 0.0
    %632 = vmatprep.subr.mxu0 0.0
    %633 = vmatpush1.msra.mxu0 0.0
    %634 = vmatprep.subr.mxu0 0.0
    %635 = vmatpush1.msra.mxu0 0.0
    %636 = vmatprep.subr.mxu0 0.0
    %637 = vmatpush1.msra.mxu0 0.0
    %638 = vmatprep.subr.mxu0 0.0
    %639 = vmatpush1.msra.mxu0 0.0
    %640 = vmatprep.subr.mxu0 0.0
    %641 = vmatpush1.msra.mxu0 0.0
    %642 = vmatprep.subr.mxu0 0.0
    %643 = vmatpush1.msra.mxu0 0.0
    %644 = vmatprep.subr.mxu0 0.0
    %645 = vmatpush1.msra.mxu0 0.0
    %646 = vmatprep.subr.mxu0 0.0
    %647 = vmatpush1.msra.mxu0 0.0
    %648 = vmatprep.subr.mxu0 0.0
    %649 = vmatpush1.msra.mxu0 0.0
    %650 = vmatprep.subr.mxu0 0.0
    %651 = vmatpush1.msra.mxu0 0.0
    %652 = vmatprep.subr.mxu0 0.0
    %653 = vmatpush1.msra.mxu0 0.0
    %654 = vmatprep.subr.mxu0 0.0
    %655 = vmatpush1.msra.mxu0 0.0
    %656 = vmatprep.subr.mxu0 0.0
    %657 = vmatpush1.msra.mxu0 0.0
    %658 = vmatprep.subr.mxu0 0.0
    %659 = vmatpush1.msra.mxu0 0.0
    %660 = vmatprep.mubr.f32.mxu0 0.0
    %661 = vmatmul.mubr.f32.gmra.mrb[0].mxu0 %v523
    %v662 = vpop.f32.mrb[0].mxu0
    %v663 = vadd.f32 0.0, %v662
    %v664 = vpop.f32.mrb[0].mxu0
    %v665 = vadd.f32 0.0, %v664
    %666 = vdwg.mxu0
    %v667 = vadd.f32 %v186, %v592
    %v668 = vadd.f32 %v188, %v594
    %v669 = vadd.f32 %v299, %v663
    %v670 = vadd.f32 %v301, %v665
    %v671 = vxor.u32 %v667, 2147483648
    %v672 = vmul.f32 %v671, 1.442695
    %v673 = vpow.pop %v672
    %v674 = vadd.f32 %v673, 1.0
    %v675 = vrcp.pop %v674
    %v676 = vmul.f32 1.0, %v675
    %v677 = vxor.u32 %v668, 2147483648
    %v678 = vmul.f32 %v677, 1.442695
    %v679 = vpow.pop %v678
    %v680 = vadd.f32 %v679, 1.0
    %v681 = vrcp.pop %v680
    %v682 = vmul.f32 1.0, %v681
    %v683 = vtanh.pop %v669
    %v684 = vxor.u32 %v670, 2147483648
    %v685 = vmul.f32 %v684, 1.442695
    %v686 = vpow.pop %v685
    %v687 = vadd.f32 %v686, 1.0
    %v688 = vrcp.pop %v687
    %v689 = vmul.f32 1.0, %v688
    %v690 = vmul.f32 %v682, %v521
    %v691 = vmul.f32 %v676, %v683
    %v692 = vadd.f32 %v690, %v691
    %v693 = vtanh.pop %v692
    %v694 = vmul.f32 %v689, %v693
    %vm695 = vcmp.gt.s32.totalorder %v339, 1
    %v696 = vsel %vm695, 1, 0
    %697 = vset.pattern.permute.xlu0 0
    %698 = vperm.xlu0 %697, %v696
    %v699 = vpop.permute.xlu0 %698
    %vm700 = vcmp.eq.s32.totalorder %v699, 1
    %v701 = vsel %vm700, %v694, %v520
    %v702 = vsel %vm700, %v692, %v521
    %v704 = vsel %vm340, %v701, 0
    %706 = vmatprep.subr.mxu0 %v50
    %707 = vmatpush1.msra.mxu0 %v49
    %708 = vmatprep.subr.mxu0 %v54
    %709 = vmatpush1.msra.mxu0 %v53
    %710 = vmatprep.subr.mxu0 0.0
    %711 = vmatpush1.msra.mxu0 0.0
    %712 = vmatprep.subr.mxu0 0.0
    %713 = vmatpush1.msra.mxu0 0.0
    %714 = vmatprep.subr.mxu0 0.0
    %715 = vmatpush1.msra.mxu0 0.0
    %716 = vmatprep.subr.mxu0 0.0
    %717 = vmatpush1.msra.mxu0 0.0
    %718 = vmatprep.subr.mxu0 0.0
    %719 = vmatpush1.msra.mxu0 0.0
    %720 = vmatprep.subr.mxu0 0.0
    %721 = vmatpush1.msra.mxu0 0.0
    %722 = vmatprep.subr.mxu0 0.0
    %723 = vmatpush1.msra.mxu0 0.0
    %724 = vmatprep.subr.mxu0 0.0
    %725 = vmatpush1.msra.mxu0 0.0
    %726 = vmatprep.subr.mxu0 0.0
    %727 = vmatpush1.msra.mxu0 0.0
    %728 = vmatprep.subr.mxu0 0.0
    %729 = vmatpush1.msra.mxu0 0.0
    %730 = vmatprep.subr.mxu0 0.0
    %731 = vmatpush1.msra.mxu0 0.0
    %732 = vmatprep.subr.mxu0 0.0
    %733 = vmatpush1.msra.mxu0 0.0
    %734 = vmatprep.subr.mxu0 0.0
    %735 = vmatpush1.msra.mxu0 0.0
    %736 = vmatprep.subr.mxu0 0.0
    %737 = vmatpush1.msra.mxu0 0.0
    %738 = vmatprep.subr.mxu0 0.0
    %739 = vmatpush1.msra.mxu0 0.0
    %740 = vmatprep.subr.mxu0 0.0
    %741 = vmatpush1.msra.mxu0 0.0
    %742 = vmatprep.subr.mxu0 0.0
    %743 = vmatpush1.msra.mxu0 0.0
    %744 = vmatprep.subr.mxu0 0.0
    %745 = vmatpush1.msra.mxu0 0.0
    %746 = vmatprep.subr.mxu0 0.0
    %747 = vmatpush1.msra.mxu0 0.0
    %748 = vmatprep.subr.mxu0 0.0
    %749 = vmatpush1.msra.mxu0 0.0
    %750 = vmatprep.subr.mxu0 0.0
    %751 = vmatpush1.msra.mxu0 0.0
    %752 = vmatprep.subr.mxu0 0.0
    %753 = vmatpush1.msra.mxu0 0.0
    %754 = vmatprep.subr.mxu0 0.0
    %755 = vmatpush1.msra.mxu0 0.0
    %756 = vmatprep.subr.mxu0 0.0
    %757 = vmatpush1.msra.mxu0 0.0
    %758 = vmatprep.subr.mxu0 0.0
    %759 = vmatpush1.msra.mxu0 0.0
    %760 = vmatprep.subr.mxu0 0.0
    %761 = vmatpush1.msra.mxu0 0.0
    %762 = vmatprep.subr.mxu0 0.0
    %763 = vmatpush1.msra.mxu0 0.0
    %764 = vmatprep.subr.mxu0 0.0
    %765 = vmatpush1.msra.mxu0 0.0
    %766 = vmatprep.subr.mxu0 0.0
    %767 = vmatpush1.msra.mxu0 0.0
    %768 = vmatprep.subr.mxu0 0.0
    %769 = vmatpush1.msra.mxu0 0.0
    %770 = vmatprep.mubr.f32.mxu0 0.0
    %771 = vmatmul.mubr.f32.gmra.mrb[0].mxu0 %v704
    %v772 = vpop.f32.mrb[0].mxu0
    %v773 = vadd.f32 0.0, %v772
    %v774 = vpop.f32.mrb[0].mxu0
    %v775 = vadd.f32 0.0, %v774
    %776 = vdwg.mxu0
    %777 = vmatprep.subr.mxu0 %v52
    %778 = vmatpush1.msra.mxu0 %v51
    %779 = vmatprep.subr.mxu0 %v56
    %780 = vmatpush1.msra.mxu0 %v55
    %781 = vmatprep.subr.mxu0 0.0
    %782 = vmatpush1.msra.mxu0 0.0
    %783 = vmatprep.subr.mxu0 0.0
    %784 = vmatpush1.msra.mxu0 0.0
    %785 = vmatprep.subr.mxu0 0.0
    %786 = vmatpush1.msra.mxu0 0.0
    %787 = vmatprep.subr.mxu0 0.0
    %788 = vmatpush1.msra.mxu0 0.0
    %789 = vmatprep.subr.mxu0 0.0
    %790 = vmatpush1.msra.mxu0 0.0
    %791 = vmatprep.subr.mxu0 0.0
    %792 = vmatpush1.msra.mxu0 0.0
    %793 = vmatprep.subr.mxu0 0.0
    %794 = vmatpush1.msra.mxu0 0.0
    %795 = vmatprep.subr.mxu0 0.0
    %796 = vmatpush1.msra.mxu0 0.0
    %797 = vmatprep.subr.mxu0 0.0
    %798 = vmatpush1.msra.mxu0 0.0
    %799 = vmatprep.subr.mxu0 0.0
    %800 = vmatpush1.msra.mxu0 0.0
    %801 = vmatprep.subr.mxu0 0.0
    %802 = vmatpush1.msra.mxu0 0.0
    %803 = vmatprep.subr.mxu0 0.0
    %804 = vmatpush1.msra.mxu0 0.0
    %805 = vmatprep.subr.mxu0 0.0
    %806 = vmatpush1.msra.mxu0 0.0
    %807 = vmatprep.subr.mxu0 0.0
    %808 = vmatpush1.msra.mxu0 0.0
    %809 = vmatprep.subr.mxu0 0.0
    %810 = vmatpush1.msra.mxu0 0.0
    %811 = vmatprep.subr.mxu0 0.0
    %812 = vmatpush1.msra.mxu0 0.0
    %813 = vmatprep.subr.mxu0 0.0
    %814 = vmatpush1.msra.mxu0 0.0
    %815 = vmatprep.subr.mxu0 0.0
    %816 = vmatpush1.msra.mxu0 0.0
    %817 = vmatprep.subr.mxu0 0.0
    %818 = vmatpush1.msra.mxu0 0.0
    %819 = vmatprep.subr.mxu0 0.0
    %820 = vmatpush1.msra.mxu0 0.0
    %821 = vmatprep.subr.mxu0 0.0
    %822 = vmatpush1.msra.mxu0 0.0
    %823 = vmatprep.subr.mxu0 0.0
    %824 = vmatpush1.msra.mxu0 0.0
    %825 = vmatprep.subr.mxu0 0.0
    %826 = vmatpush1.msra.mxu0 0.0
    %827 = vmatprep.subr.mxu0 0.0
    %828 = vmatpush1.msra.mxu0 0.0
    %829 = vmatprep.subr.mxu0 0.0
    %830 = vmatpush1.msra.mxu0 0.0
    %831 = vmatprep.subr.mxu0 0.0
    %832 = vmatpush1.msra.mxu0 0.0
    %833 = vmatprep.subr.mxu0 0.0
    %834 = vmatpush1.msra.mxu0 0.0
    %835 = vmatprep.subr.mxu0 0.0
    %836 = vmatpush1.msra.mxu0 0.0
    %837 = vmatprep.subr.mxu0 0.0
    %838 = vmatpush1.msra.mxu0 0.0
    %839 = vmatprep.subr.mxu0 0.0
    %840 = vmatpush1.msra.mxu0 0.0
    %841 = vmatprep.mubr.f32.mxu0 0.0
    %842 = vmatmul.mubr.f32.gmra.mrb[0].mxu0 %v704
    %v843 = vpop.f32.mrb[0].mxu0
    %v844 = vadd.f32 0.0, %v843
    %v845 = vpop.f32.mrb[0].mxu0
    %v846 = vadd.f32 0.0, %v845
    %847 = vdwg.mxu0
    %v848 = vadd.f32 %v192, %v773
    %v849 = vadd.f32 %v194, %v775
    %v850 = vadd.f32 %v305, %v844
    %v851 = vadd.f32 %v307, %v846
    %v852 = vxor.u32 %v848, 2147483648
    %v853 = vmul.f32 %v852, 1.442695
    %v854 = vpow.pop %v853
    %v855 = vadd.f32 %v854, 1.0
    %v856 = vrcp.pop %v855
    %v857 = vmul.f32 1.0, %v856
    %v858 = vxor.u32 %v849, 2147483648
    %v859 = vmul.f32 %v858, 1.442695
    %v860 = vpow.pop %v859
    %v861 = vadd.f32 %v860, 1.0
    %v862 = vrcp.pop %v861
    %v863 = vmul.f32 1.0, %v862
    %v864 = vtanh.pop %v850
    %v865 = vxor.u32 %v851, 2147483648
    %v866 = vmul.f32 %v865, 1.442695
    %v867 = vpow.pop %v866
    %v868 = vadd.f32 %v867, 1.0
    %v869 = vrcp.pop %v868
    %v870 = vmul.f32 1.0, %v869
    %v871 = vmul.f32 %v863, %v702
    %v872 = vmul.f32 %v857, %v864
    %v873 = vadd.f32 %v871, %v872
    %v874 = vtanh.pop %v873
    %v875 = vmul.f32 %v870, %v874
    %vm876 = vcmp.gt.s32.totalorder %v339, 2
    %v877 = vsel %vm876, 1, 0
    %878 = vset.pattern.permute.xlu0 0
    %879 = vperm.xlu0 %878, %v877
    %v880 = vpop.permute.xlu0 %879
    %vm881 = vcmp.eq.s32.totalorder %v880, 1
    %v882 = vsel %vm881, %v875, %v701
    %v883 = vsel %vm881, %v873, %v702
    %v885 = vsel %vm340, %v882, 0
    %887 = vmatprep.subr.mxu0 %v50
    %888 = vmatpush1.msra.mxu0 %v49
    %889 = vmatprep.subr.mxu0 %v54
    %890 = vmatpush1.msra.mxu0 %v53
    %891 = vmatprep.subr.mxu0 0.0
    %892 = vmatpush1.msra.mxu0 0.0
    %893 = vmatprep.subr.mxu0 0.0
    %894 = vmatpush1.msra.mxu0 0.0
    %895 = vmatprep.subr.mxu0 0.0
    %896 = vmatpush1.msra.mxu0 0.0
    %897 = vmatprep.subr.mxu0 0.0
    %898 = vmatpush1.msra.mxu0 0.0
    %899 = vmatprep.subr.mxu0 0.0
    %900 = vmatpush1.msra.mxu0 0.0
    %901 = vmatprep.subr.mxu0 0.0
    %902 = vmatpush1.msra.mxu0 0.0
    %903 = vmatprep.subr.mxu0 0.0
    %904 = vmatpush1.msra.mxu0 0.0
    %905 = vmatprep.subr.mxu0 0.0
    %906 = vmatpush1.msra.mxu0 0.0
    %907 = vmatprep.subr.mxu0 0.0
    %908 = vmatpush1.msra.mxu0 0.0
    %909 = vmatprep.subr.mxu0 0.0
    %910 = vmatpush1.msra.mxu0 0.0
    %911 = vmatprep.subr.mxu0 0.0
    %912 = vmatpush1.msra.mxu0 0.0
    %913 = vmatprep.subr.mxu0 0.0
    %914 = vmatpush1.msra.mxu0 0.0
    %915 = vmatprep.subr.mxu0 0.0
    %916 = vmatpush1.msra.mxu0 0.0
    %917 = vmatprep.subr.mxu0 0.0
    %918 = vmatpush1.msra.mxu0 0.0
    %919 = vmatprep.subr.mxu0 0.0
    %920 = vmatpush1.msra.mxu0 0.0
    %921 = vmatprep.subr.mxu0 0.0
    %922 = vmatpush1.msra.mxu0 0.0
    %923 = vmatprep.subr.mxu0 0.0
    %924 = vmatpush1.msra.mxu0 0.0
    %925 = vmatprep.subr.mxu0 0.0
    %926 = vmatpush1.msra.mxu0 0.0
    %927 = vmatprep.subr.mxu0 0.0
    %928 = vmatpush1.msra.mxu0 0.0
    %929 = vmatprep.subr.mxu0 0.0
    %930 = vmatpush1.msra.mxu0 0.0
    %931 = vmatprep.subr.mxu0 0.0
    %932 = vmatpush1.msra.mxu0 0.0
    %933 = vmatprep.subr.mxu0 0.0
    %934 = vmatpush1.msra.mxu0 0.0
    %935 = vmatprep.subr.mxu0 0.0
    %936 = vmatpush1.msra.mxu0 0.0
    %937 = vmatprep.subr.mxu0 0.0
    %938 = vmatpush1.msra.mxu0 0.0
    %939 = vmatprep.subr.mxu0 0.0
    %940 = vmatpush1.msra.mxu0 0.0
    %941 = vmatprep.subr.mxu0 0.0
    %942 = vmatpush1.msra.mxu0 0.0
    %943 = vmatprep.subr.mxu0 0.0
    %944 = vmatpush1.msra.mxu0 0.0
    %945 = vmatprep.subr.mxu0 0.0
    %946 = vmatpush1.msra.mxu0 0.0
    %947 = vmatprep.subr.mxu0 0.0
    %948 = vmatpush1.msra.mxu0 0.0
    %949 = vmatprep.subr.mxu0 0.0
    %950 = vmatpush1.msra.mxu0 0.0
    %951 = vmatprep.mubr.f32.mxu0 0.0
    %952 = vmatmul.mubr.f32.gmra.mrb[0].mxu0 %v885
    %v953 = vpop.f32.mrb[0].mxu0
    %v954 = vadd.f32 0.0, %v953
    %v955 = vpop.f32.mrb[0].mxu0
    %v956 = vadd.f32 0.0, %v955
    %957 = vdwg.mxu0
    %958 = vmatprep.subr.mxu0 %v52
    %959 = vmatpush1.msra.mxu0 %v51
    %960 = vmatprep.subr.mxu0 %v56
    %961 = vmatpush1.msra.mxu0 %v55
    %962 = vmatprep.subr.mxu0 0.0
    %963 = vmatpush1.msra.mxu0 0.0
    %964 = vmatprep.subr.mxu0 0.0
    %965 = vmatpush1.msra.mxu0 0.0
    %966 = vmatprep.subr.mxu0 0.0
    %967 = vmatpush1.msra.mxu0 0.0
    %968 = vmatprep.subr.mxu0 0.0
    %969 = vmatpush1.msra.mxu0 0.0
    %970 = vmatprep.subr.mxu0 0.0
    %971 = vmatpush1.msra.mxu0 0.0
    %972 = vmatprep.subr.mxu0 0.0
    %973 = vmatpush1.msra.mxu0 0.0
    %974 = vmatprep.subr.mxu0 0.0
    %975 = vmatpush1.msra.mxu0 0.0
    %976 = vmatprep.subr.mxu0 0.0
    %977 = vmatpush1.msra.mxu0 0.0
    %978 = vmatprep.subr.mxu0 0.0
    %979 = vmatpush1.msra.mxu0 0.0
    %980 = vmatprep.subr.mxu0 0.0
    %981 = vmatpush1.msra.mxu0 0.0
    %982 = vmatprep.subr.mxu0 0.0
    %983 = vmatpush1.msra.mxu0 0.0
    %984 = vmatprep.subr.mxu0 0.0
    %985 = vmatpush1.msra.mxu0 0.0
    %986 = vmatprep.subr.mxu0 0.0
    %987 = vmatpush1.msra.mxu0 0.0
    %988 = vmatprep.subr.mxu0 0.0
    %989 = vmatpush1.msra.mxu0 0.0
    %990 = vmatprep.subr.mxu0 0.0
    %991 = vmatpush1.msra.mxu0 0.0
    %992 = vmatprep.subr.mxu0 0.0
    %993 = vmatpush1.msra.mxu0 0.0
    %994 = vmatprep.subr.mxu0 0.0
    %995 = vmatpush1.msra.mxu0 0.0
    %996 = vmatprep.subr.mxu0 0.0
    %997 = vmatpush1.msra.mxu0 0.0
    %998 = vmatprep.subr.mxu0 0.0
    %999 = vmatpush1.msra.mxu0 0.0
    %1000 = vmatprep.subr.mxu0 0.0
    %1001 = vmatpush1.msra.mxu0 0.0
    %1002 = vmatprep.subr.mxu0 0.0
    %1003 = vmatpush1.msra.mxu0 0.0
    %1004 = vmatprep.subr.mxu0 0.0
    %1005 = vmatpush1.msra.mxu0 0.0
    %1006 = vmatprep.subr.mxu0 0.0
    %1007 = vmatpush1.msra.mxu0 0.0
    %1008 = vmatprep.subr.mxu0 0.0
    %1009 = vmatpush1.msra.mxu0 0.0
    %1010 = vmatprep.subr.mxu0 0.0
    %1011 = vmatpush1.msra.mxu0 0.0
    %1012 = vmatprep.subr.mxu0 0.0
    %1013 = vmatpush1.msra.mxu0 0.0
    %1014 = vmatprep.subr.mxu0 0.0
    %1015 = vmatpush1.msra.mxu0 0.0
    %1016 = vmatprep.subr.mxu0 0.0
    %1017 = vmatpush1.msra.mxu0 0.0
    %1018 = vmatprep.subr.mxu0 0.0
    %1019 = vmatpush1.msra.mxu0 0.0
    %1020 = vmatprep.subr.mxu0 0.0
    %1021 = vmatpush1.msra.mxu0 0.0
    %1022 = vmatprep.mubr.f32.mxu0 0.0
    %1023 = vmatmul.mubr.f32.gmra.mrb[0].mxu0 %v885
    %v1024 = vpop.f32.mrb[0].mxu0
    %v1025 = vadd.f32 0.0, %v1024
    %v1026 = vpop.f32.mrb[0].mxu0
    %v1027 = vadd.f32 0.0, %v1026
    %1028 = vdwg.mxu0
    %v1029 = vadd.f32 %v198, %v954
    %v1030 = vadd.f32 %v200, %v956
    %v1031 = vadd.f32 %v311, %v1025
    %v1032 = vadd.f32 %v313, %v1027
    %v1033 = vxor.u32 %v1029, 2147483648
    %v1034 = vmul.f32 %v1033, 1.442695
    %v1035 = vpow.pop %v1034
    %v1036 = vadd.f32 %v1035, 1.0
    %v1037 = vrcp.pop %v1036
    %v1038 = vmul.f32 1.0, %v1037
    %v1039 = vxor.u32 %v1030, 2147483648
    %v1040 = vmul.f32 %v1039, 1.442695
    %v1041 = vpow.pop %v1040
    %v1042 = vadd.f32 %v1041, 1.0
    %v1043 = vrcp.pop %v1042
    %v1044 = vmul.f32 1.0, %v1043
    %v1045 = vtanh.pop %v1031
    %v1046 = vxor.u32 %v1032, 2147483648
    %v1047 = vmul.f32 %v1046, 1.442695
    %v1048 = vpow.pop %v1047
    %v1049 = vadd.f32 %v1048, 1.0
    %v1050 = vrcp.pop %v1049
    %v1051 = vmul.f32 1.0, %v1050
    %v1052 = vmul.f32 %v1044, %v883
    %v1053 = vmul.f32 %v1038, %v1045
    %v1054 = vadd.f32 %v1052, %v1053
    %v1055 = vtanh.pop %v1054
    %v1056 = vmul.f32 %v1051, %v1055
    %vm1057 = vcmp.gt.s32.totalorder %v339, 3
    %v1058 = vsel %vm1057, 1, 0
    %1059 = vset.pattern.permute.xlu0 0
    %1060 = vperm.xlu0 %1059, %v1058
    %v1061 = vpop.permute.xlu0 %1060
    %vm1062 = vcmp.eq.s32.totalorder %v1061, 1
    %v1063 = vsel %vm1062, %v1056, %v882
    %v1064 = vsel %vm1062, %v1054, %v883
    %v1066 = vsel %vm340, %v1063, 0
    %1068 = vmatprep.subr.mxu0 %v50
    %1069 = vmatpush1.msra.mxu0 %v49
    %1070 = vmatprep.subr.mxu0 %v54
    %1071 = vmatpush1.msra.mxu0 %v53
    %1072 = vmatprep.subr.mxu0 0.0
    %1073 = vmatpush1.msra.mxu0 0.0
    %1074 = vmatprep.subr.mxu0 0.0
    %1075 = vmatpush1.msra.mxu0 0.0
    %1076 = vmatprep.subr.mxu0 0.0
    %1077 = vmatpush1.msra.mxu0 0.0
    %1078 = vmatprep.subr.mxu0 0.0
    %1079 = vmatpush1.msra.mxu0 0.0
    %1080 = vmatprep.subr.mxu0 0.0
    %1081 = vmatpush1.msra.mxu0 0.0
    %1082 = vmatprep.subr.mxu0 0.0
    %1083 = vmatpush1.msra.mxu0 0.0
    %1084 = vmatprep.subr.mxu0 0.0
    %1085 = vmatpush1.msra.mxu0 0.0
    %1086 = vmatprep.subr.mxu0 0.0
    %1087 = vmatpush1.msra.mxu0 0.0
    %1088 = vmatprep.subr.mxu0 0.0
    %1089 = vmatpush1.msra.mxu0 0.0
    %1090 = vmatprep.subr.mxu0 0.0
    %1091 = vmatpush1.msra.mxu0 0.0
    %1092 = vmatprep.subr.mxu0 0.0
    %1093 = vmatpush1.msra.mxu0 0.0
    %1094 = vmatprep.subr.mxu0 0.0
    %1095 = vmatpush1.msra.mxu0 0.0
    %1096 = vmatprep.subr.mxu0 0.0
    %1097 = vmatpush1.msra.mxu0 0.0
    %1098 = vmatprep.subr.mxu0 0.0
    %1099 = vmatpush1.msra.mxu0 0.0
    %1100 = vmatprep.subr.mxu0 0.0
    %1101 = vmatpush1.msra.mxu0 0.0
    %1102 = vmatprep.subr.mxu0 0.0
    %1103 = vmatpush1.msra.mxu0 0.0
    %1104 = vmatprep.subr.mxu0 0.0
    %1105 = vmatpush1.msra.mxu0 0.0
    %1106 = vmatprep.subr.mxu0 0.0
    %1107 = vmatpush1.msra.mxu0 0.0
    %1108 = vmatprep.subr.mxu0 0.0
    %1109 = vmatpush1.msra.mxu0 0.0
    %1110 = vmatprep.subr.mxu0 0.0
    %1111 = vmatpush1.msra.mxu0 0.0
    %1112 = vmatprep.subr.mxu0 0.0
    %1113 = vmatpush1.msra.mxu0 0.0
    %1114 = vmatprep.subr.mxu0 0.0
    %1115 = vmatpush1.msra.mxu0 0.0
    %1116 = vmatprep.subr.mxu0 0.0
    %1117 = vmatpush1.msra.mxu0 0.0
    %1118 = vmatprep.subr.mxu0 0.0
    %1119 = vmatpush1.msra.mxu0 0.0
    %1120 = vmatprep.subr.mxu0 0.0
    %1121 = vmatpush1.msra.mxu0 0.0
    %1122 = vmatprep.subr.mxu0 0.0
    %1123 = vmatpush1.msra.mxu0 0.0
    %1124 = vmatprep.subr.mxu0 0.0
    %1125 = vmatpush1.msra.mxu0 0.0
    %1126 = vmatprep.subr.mxu0 0.0
    %1127 = vmatpush1.msra.mxu0 0.0
    %1128 = vmatprep.subr.mxu0 0.0
    %1129 = vmatpush1.msra.mxu0 0.0
    %1130 = vmatprep.subr.mxu0 0.0
    %1131 = vmatpush1.msra.mxu0 0.0
    %1132 = vmatprep.mubr.f32.mxu0 0.0
    %1133 = vmatmul.mubr.f32.gmra.mrb[0].mxu0 %v1066
    %v1134 = vpop.f32.mrb[0].mxu0
    %v1135 = vadd.f32 0.0, %v1134
    %v1136 = vpop.f32.mrb[0].mxu0
    %v1137 = vadd.f32 0.0, %v1136
    %1138 = vdwg.mxu0
    %1139 = vmatprep.subr.mxu0 %v52
    %1140 = vmatpush1.msra.mxu0 %v51
    %1141 = vmatprep.subr.mxu0 %v56
    %1142 = vmatpush1.msra.mxu0 %v55
    %1143 = vmatprep.subr.mxu0 0.0
    %1144 = vmatpush1.msra.mxu0 0.0
    %1145 = vmatprep.subr.mxu0 0.0
    %1146 = vmatpush1.msra.mxu0 0.0
    %1147 = vmatprep.subr.mxu0 0.0
    %1148 = vmatpush1.msra.mxu0 0.0
    %1149 = vmatprep.subr.mxu0 0.0
    %1150 = vmatpush1.msra.mxu0 0.0
    %1151 = vmatprep.subr.mxu0 0.0
    %1152 = vmatpush1.msra.mxu0 0.0
    %1153 = vmatprep.subr.mxu0 0.0
    %1154 = vmatpush1.msra.mxu0 0.0
    %1155 = vmatprep.subr.mxu0 0.0
    %1156 = vmatpush1.msra.mxu0 0.0
    %1157 = vmatprep.subr.mxu0 0.0
    %1158 = vmatpush1.msra.mxu0 0.0
    %1159 = vmatprep.subr.mxu0 0.0
    %1160 = vmatpush1.msra.mxu0 0.0
    %1161 = vmatprep.subr.mxu0 0.0
    %1162 = vmatpush1.msra.mxu0 0.0
    %1163 = vmatprep.subr.mxu0 0.0
    %1164 = vmatpush1.msra.mxu0 0.0
    %1165 = vmatprep.subr.mxu0 0.0
    %1166 = vmatpush1.msra.mxu0 0.0
    %1167 = vmatprep.subr.mxu0 0.0
    %1168 = vmatpush1.msra.mxu0 0.0
    %1169 = vmatprep.subr.mxu0 0.0
    %1170 = vmatpush1.msra.mxu0 0.0
    %1171 = vmatprep.subr.mxu0 0.0
    %1172 = vmatpush1.msra.mxu0 0.0
    %1173 = vmatprep.subr.mxu0 0.0
    %1174 = vmatpush1.msra.mxu0 0.0
    %1175 = vmatprep.subr.mxu0 0.0
    %1176 = vmatpush1.msra.mxu0 0.0
    %1177 = vmatprep.subr.mxu0 0.0
    %1178 = vmatpush1.msra.mxu0 0.0
    %1179 = vmatprep.subr.mxu0 0.0
    %1180 = vmatpush1.msra.mxu0 0.0
    %1181 = vmatprep.subr.mxu0 0.0
    %1182 = vmatpush1.msra.mxu0 0.0
    %1183 = vmatprep.subr.mxu0 0.0
    %1184 = vmatpush1.msra.mxu0 0.0
    %1185 = vmatprep.subr.mxu0 0.0
    %1186 = vmatpush1.msra.mxu0 0.0
    %1187 = vmatprep.subr.mxu0 0.0
    %1188 = vmatpush1.msra.mxu0 0.0
    %1189 = vmatprep.subr.mxu0 0.0
    %1190 = vmatpush1.msra.mxu0 0.0
    %1191 = vmatprep.subr.mxu0 0.0
    %1192 = vmatpush1.msra.mxu0 0.0
    %1193 = vmatprep.subr.mxu0 0.0
    %1194 = vmatpush1.msra.mxu0 0.0
    %1195 = vmatprep.subr.mxu0 0.0
    %1196 = vmatpush1.msra.mxu0 0.0
    %1197 = vmatprep.subr.mxu0 0.0
    %1198 = vmatpush1.msra.mxu0 0.0
    %1199 = vmatprep.subr.mxu0 0.0
    %1200 = vmatpush1.msra.mxu0 0.0
    %1201 = vmatprep.subr.mxu0 0.0
    %1202 = vmatpush1.msra.mxu0 0.0
    %1203 = vmatprep.mubr.f32.mxu0 0.0
    %1204 = vmatmul.mubr.f32.gmra.mrb[0].mxu0 %v1066
    %v1205 = vpop.f32.mrb[0].mxu0
    %v1206 = vadd.f32 0.0, %v1205
    %v1207 = vpop.f32.mrb[0].mxu0
    %v1208 = vadd.f32 0.0, %v1207
    %1209 = vdwg.mxu0
    %v1210 = vadd.f32 %v204, %v1135
    %v1211 = vadd.f32 %v206, %v1137
    %v1212 = vadd.f32 %v317, %v1206
    %v1213 = vadd.f32 %v319, %v1208
    %v1214 = vxor.u32 %v1210, 2147483648
    %v1215 = vmul.f32 %v1214, 1.442695
    %v1216 = vpow.pop %v1215
    %v1217 = vadd.f32 %v1216, 1.0
    %v1218 = vrcp.pop %v1217
    %v1219 = vmul.f32 1.0, %v1218
    %v1220 = vxor.u32 %v1211, 2147483648
    %v1221 = vmul.f32 %v1220, 1.442695
    %v1222 = vpow.pop %v1221
    %v1223 = vadd.f32 %v1222, 1.0
    %v1224 = vrcp.pop %v1223
    %v1225 = vmul.f32 1.0, %v1224
    %v1226 = vtanh.pop %v1212
    %v1227 = vxor.u32 %v1213, 2147483648
    %v1228 = vmul.f32 %v1227, 1.442695
    %v1229 = vpow.pop %v1228
    %v1230 = vadd.f32 %v1229, 1.0
    %v1231 = vrcp.pop %v1230
    %v1232 = vmul.f32 1.0, %v1231
    %v1233 = vmul.f32 %v1225, %v1064
    %v1234 = vmul.f32 %v1219, %v1226
    %v1235 = vadd.f32 %v1233, %v1234
    %v1236 = vtanh.pop %v1235
    %v1237 = vmul.f32 %v1232, %v1236
    %vm1238 = vcmp.gt.s32.totalorder %v339, 4
    %v1239 = vsel %vm1238, 1, 0
    %1240 = vset.pattern.permute.xlu0 0
    %1241 = vperm.xlu0 %1240, %v1239
    %v1242 = vpop.permute.xlu0 %1241
    %vm1243 = vcmp.eq.s32.totalorder %v1242, 1
    %v1244 = vsel %vm1243, %v1237, %v1063
    %v1245 = vsel %vm1243, %v1235, %v1064
    %v1247 = vsel %vm340, %v1244, 0
    %1249 = vmatprep.subr.mxu0 %v50
    %1250 = vmatpush1.msra.mxu0 %v49
    %1251 = vmatprep.subr.mxu0 %v54
    %1252 = vmatpush1.msra.mxu0 %v53
    %1253 = vmatprep.subr.mxu0 0.0
    %1254 = vmatpush1.msra.mxu0 0.0
    %1255 = vmatprep.subr.mxu0 0.0
    %1256 = vmatpush1.msra.mxu0 0.0
    %1257 = vmatprep.subr.mxu0 0.0
    %1258 = vmatpush1.msra.mxu0 0.0
    %1259 = vmatprep.subr.mxu0 0.0
    %1260 = vmatpush1.msra.mxu0 0.0
    %1261 = vmatprep.subr.mxu0 0.0
    %1262 = vmatpush1.msra.mxu0 0.0
    %1263 = vmatprep.subr.mxu0 0.0
    %1264 = vmatpush1.msra.mxu0 0.0
    %1265 = vmatprep.subr.mxu0 0.0
    %1266 = vmatpush1.msra.mxu0 0.0
    %1267 = vmatprep.subr.mxu0 0.0
    %1268 = vmatpush1.msra.mxu0 0.0
    %1269 = vmatprep.subr.mxu0 0.0
    %1270 = vmatpush1.msra.mxu0 0.0
    %1271 = vmatprep.subr.mxu0 0.0
    %1272 = vmatpush1.msra.mxu0 0.0
    %1273 = vmatprep.subr.mxu0 0.0
    %1274 = vmatpush1.msra.mxu0 0.0
    %1275 = vmatprep.subr.mxu0 0.0
    %1276 = vmatpush1.msra.mxu0 0.0
    %1277 = vmatprep.subr.mxu0 0.0
    %1278 = vmatpush1.msra.mxu0 0.0
    %1279 = vmatprep.subr.mxu0 0.0
    %1280 = vmatpush1.msra.mxu0 0.0
    %1281 = vmatprep.subr.mxu0 0.0
    %1282 = vmatpush1.msra.mxu0 0.0
    %1283 = vmatprep.subr.mxu0 0.0
    %1284 = vmatpush1.msra.mxu0 0.0
    %1285 = vmatprep.subr.mxu0 0.0
    %1286 = vmatpush1.msra.mxu0 0.0
    %1287 = vmatprep.subr.mxu0 0.0
    %1288 = vmatpush1.msra.mxu0 0.0
    %1289 = vmatprep.subr.mxu0 0.0
    %1290 = vmatpush1.msra.mxu0 0.0
    %1291 = vmatprep.subr.mxu0 0.0
    %1292 = vmatpush1.msra.mxu0 0.0
    %1293 = vmatprep.subr.mxu0 0.0
    %1294 = vmatpush1.msra.mxu0 0.0
    %1295 = vmatprep.subr.mxu0 0.0
    %1296 = vmatpush1.msra.mxu0 0.0
    %1297 = vmatprep.subr.mxu0 0.0
    %1298 = vmatpush1.msra.mxu0 0.0
    %1299 = vmatprep.subr.mxu0 0.0
    %1300 = vmatpush1.msra.mxu0 0.0
    %1301 = vmatprep.subr.mxu0 0.0
    %1302 = vmatpush1.msra.mxu0 0.0
    %1303 = vmatprep.subr.mxu0 0.0
    %1304 = vmatpush1.msra.mxu0 0.0
    %1305 = vmatprep.subr.mxu0 0.0
    %1306 = vmatpush1.msra.mxu0 0.0
    %1307 = vmatprep.subr.mxu0 0.0
    %1308 = vmatpush1.msra.mxu0 0.0
    %1309 = vmatprep.subr.mxu0 0.0
    %1310 = vmatpush1.msra.mxu0 0.0
    %1311 = vmatprep.subr.mxu0 0.0
    %1312 = vmatpush1.msra.mxu0 0.0
    %1313 = vmatprep.mubr.f32.mxu0 0.0
    %1314 = vmatmul.mubr.f32.gmra.mrb[0].mxu0 %v1247
    %v1315 = vpop.f32.mrb[0].mxu0
    %v1316 = vadd.f32 0.0, %v1315
    %v1317 = vpop.f32.mrb[0].mxu0
    %v1318 = vadd.f32 0.0, %v1317
    %1319 = vdwg.mxu0
    %1320 = vmatprep.subr.mxu0 %v52
    %1321 = vmatpush1.msra.mxu0 %v51
    %1322 = vmatprep.subr.mxu0 %v56
    %1323 = vmatpush1.msra.mxu0 %v55
    %1324 = vmatprep.subr.mxu0 0.0
    %1325 = vmatpush1.msra.mxu0 0.0
    %1326 = vmatprep.subr.mxu0 0.0
    %1327 = vmatpush1.msra.mxu0 0.0
    %1328 = vmatprep.subr.mxu0 0.0
    %1329 = vmatpush1.msra.mxu0 0.0
    %1330 = vmatprep.subr.mxu0 0.0
    %1331 = vmatpush1.msra.mxu0 0.0
    %1332 = vmatprep.subr.mxu0 0.0
    %1333 = vmatpush1.msra.mxu0 0.0
    %1334 = vmatprep.subr.mxu0 0.0
    %1335 = vmatpush1.msra.mxu0 0.0
    %1336 = vmatprep.subr.mxu0 0.0
    %1337 = vmatpush1.msra.mxu0 0.0
    %1338 = vmatprep.subr.mxu0 0.0
    %1339 = vmatpush1.msra.mxu0 0.0
    %1340 = vmatprep.subr.mxu0 0.0
    %1341 = vmatpush1.msra.mxu0 0.0
    %1342 = vmatprep.subr.mxu0 0.0
    %1343 = vmatpush1.msra.mxu0 0.0
    %1344 = vmatprep.subr.mxu0 0.0
    %1345 = vmatpush1.msra.mxu0 0.0
    %1346 = vmatprep.subr.mxu0 0.0
    %1347 = vmatpush1.msra.mxu0 0.0
    %1348 = vmatprep.subr.mxu0 0.0
    %1349 = vmatpush1.msra.mxu0 0.0
    %1350 = vmatprep.subr.mxu0 0.0
    %1351 = vmatpush1.msra.mxu0 0.0
    %1352 = vmatprep.subr.mxu0 0.0
    %1353 = vmatpush1.msra.mxu0 0.0
    %1354 = vmatprep.subr.mxu0 0.0
    %1355 = vmatpush1.msra.mxu0 0.0
    %1356 = vmatprep.subr.mxu0 0.0
    %1357 = vmatpush1.msra.mxu0 0.0
    %1358 = vmatprep.subr.mxu0 0.0
    %1359 = vmatpush1.msra.mxu0 0.0
    %1360 = vmatprep.subr.mxu0 0.0
    %1361 = vmatpush1.msra.mxu0 0.0
    %1362 = vmatprep.subr.mxu0 0.0
    %1363 = vmatpush1.msra.mxu0 0.0
    %1364 = vmatprep.subr.mxu0 0.0
    %1365 = vmatpush1.msra.mxu0 0.0
    %1366 = vmatprep.subr.mxu0 0.0
    %1367 = vmatpush1.msra.mxu0 0.0
    %1368 = vmatprep.subr.mxu0 0.0
    %1369 = vmatpush1.msra.mxu0 0.0
    %1370 = vmatprep.subr.mxu0 0.0
    %1371 = vmatpush1.msra.mxu0 0.0
    %1372 = vmatprep.subr.mxu0 0.0
    %1373 = vmatpush1.msra.mxu0 0.0
    %1374 = vmatprep.subr.mxu0 0.0
    %1375 = vmatpush1.msra.mxu0 0.0
    %1376 = vmatprep.subr.mxu0 0.0
    %1377 = vmatpush1.msra.mxu0 0.0
    %1378 = vmatprep.subr.mxu0 0.0
    %1379 = vmatpush1.msra.mxu0 0.0
    %1380 = vmatprep.subr.mxu0 0.0
    %1381 = vmatpush1.msra.mxu0 0.0
    %1382 = vmatprep.subr.mxu0 0.0
    %1383 = vmatpush1.msra.mxu0 0.0
    %1384 = vmatprep.mubr.f32.mxu0 0.0
    %1385 = vmatmul.mubr.f32.gmra.mrb[0].mxu0 %v1247
    %v1386 = vpop.f32.mrb[0].mxu0
    %v1387 = vadd.f32 0.0, %v1386
    %v1388 = vpop.f32.mrb[0].mxu0
    %v1389 = vadd.f32 0.0, %v1388
    %1390 = vdwg.mxu0
    %v1391 = vadd.f32 %v210, %v1316
    %v1392 = vadd.f32 %v212, %v1318
    %v1393 = vadd.f32 %v323, %v1387
    %v1394 = vadd.f32 %v325, %v1389
    %v1395 = vxor.u32 %v1391, 2147483648
    %v1396 = vmul.f32 %v1395, 1.442695
    %v1397 = vpow.pop %v1396
    %v1398 = vadd.f32 %v1397, 1.0
    %v1399 = vrcp.pop %v1398
    %v1400 = vmul.f32 1.0, %v1399
    %v1401 = vxor.u32 %v1392, 2147483648
    %v1402 = vmul.f32 %v1401, 1.442695
    %v1403 = vpow.pop %v1402
    %v1404 = vadd.f32 %v1403, 1.0
    %v1405 = vrcp.pop %v1404
    %v1406 = vmul.f32 1.0, %v1405
    %v1407 = vtanh.pop %v1393
    %v1408 = vxor.u32 %v1394, 2147483648
    %v1409 = vmul.f32 %v1408, 1.442695
    %v1410 = vpow.pop %v1409
    %v1411 = vadd.f32 %v1410, 1.0
    %v1412 = vrcp.pop %v1411
    %v1413 = vmul.f32 1.0, %v1412
    %v1414 = vmul.f32 %v1406, %v1245
    %v1415 = vmul.f32 %v1400, %v1407
    %v1416 = vadd.f32 %v1414, %v1415
    %v1417 = vtanh.pop %v1416
    %v1418 = vmul.f32 %v1413, %v1417
    %vm1419 = vcmp.gt.s32.totalorder %v339, 5
    %v1420 = vsel %vm1419, 1, 0
    %1421 = vset.pattern.permute.xlu0 0
    %1422 = vperm.xlu0 %1421, %v1420
    %v1423 = vpop.permute.xlu0 %1422
    %vm1424 = vcmp.eq.s32.totalorder %v1423, 1
    %v1425 = vsel %vm1424, %v1418, %v1244
    %v1426 = vsel %vm1424, %v1416, %v1245
    %v1428 = vsel %vm340, %v1425, 0
    %1430 = vmatprep.subr.mxu0 %v50
    %1431 = vmatpush1.msra.mxu0 %v49
    %1432 = vmatprep.subr.mxu0 %v54
    %1433 = vmatpush1.msra.mxu0 %v53
    %1434 = vmatprep.subr.mxu0 0.0
    %1435 = vmatpush1.msra.mxu0 0.0
    %1436 = vmatprep.subr.mxu0 0.0
    %1437 = vmatpush1.msra.mxu0 0.0
    %1438 = vmatprep.subr.mxu0 0.0
    %1439 = vmatpush1.msra.mxu0 0.0
    %1440 = vmatprep.subr.mxu0 0.0
    %1441 = vmatpush1.msra.mxu0 0.0
    %1442 = vmatprep.subr.mxu0 0.0
    %1443 = vmatpush1.msra.mxu0 0.0
    %1444 = vmatprep.subr.mxu0 0.0
    %1445 = vmatpush1.msra.mxu0 0.0
    %1446 = vmatprep.subr.mxu0 0.0
    %1447 = vmatpush1.msra.mxu0 0.0
    %1448 = vmatprep.subr.mxu0 0.0
    %1449 = vmatpush1.msra.mxu0 0.0
    %1450 = vmatprep.subr.mxu0 0.0
    %1451 = vmatpush1.msra.mxu0 0.0
    %1452 = vmatprep.subr.mxu0 0.0
    %1453 = vmatpush1.msra.mxu0 0.0
    %1454 = vmatprep.subr.mxu0 0.0
    %1455 = vmatpush1.msra.mxu0 0.0
    %1456 = vmatprep.subr.mxu0 0.0
    %1457 = vmatpush1.msra.mxu0 0.0
    %1458 = vmatprep.subr.mxu0 0.0
    %1459 = vmatpush1.msra.mxu0 0.0
    %1460 = vmatprep.subr.mxu0 0.0
    %1461 = vmatpush1.msra.mxu0 0.0
    %1462 = vmatprep.subr.mxu0 0.0
    %1463 = vmatpush1.msra.mxu0 0.0
    %1464 = vmatprep.subr.mxu0 0.0
    %1465 = vmatpush1.msra.mxu0 0.0
    %1466 = vmatprep.subr.mxu0 0.0
    %1467 = vmatpush1.msra.mxu0 0.0
    %1468 = vmatprep.subr.mxu0 0.0
    %1469 = vmatpush1.msra.mxu0 0.0
    %1470 = vmatprep.subr.mxu0 0.0
    %1471 = vmatpush1.msra.mxu0 0.0
    %1472 = vmatprep.subr.mxu0 0.0
    %1473 = vmatpush1.msra.mxu0 0.0
    %1474 = vmatprep.subr.mxu0 0.0
    %1475 = vmatpush1.msra.mxu0 0.0
    %1476 = vmatprep.subr.mxu0 0.0
    %1477 = vmatpush1.msra.mxu0 0.0
    %1478 = vmatprep.subr.mxu0 0.0
    %1479 = vmatpush1.msra.mxu0 0.0
    %1480 = vmatprep.subr.mxu0 0.0
    %1481 = vmatpush1.msra.mxu0 0.0
    %1482 = vmatprep.subr.mxu0 0.0
    %1483 = vmatpush1.msra.mxu0 0.0
    %1484 = vmatprep.subr.mxu0 0.0
    %1485 = vmatpush1.msra.mxu0 0.0
    %1486 = vmatprep.subr.mxu0 0.0
    %1487 = vmatpush1.msra.mxu0 0.0
    %1488 = vmatprep.subr.mxu0 0.0
    %1489 = vmatpush1.msra.mxu0 0.0
    %1490 = vmatprep.subr.mxu0 0.0
    %1491 = vmatpush1.msra.mxu0 0.0
    %1492 = vmatprep.subr.mxu0 0.0
    %1493 = vmatpush1.msra.mxu0 0.0
    %1494 = vmatprep.mubr.f32.mxu0 0.0
    %1495 = vmatmul.mubr.f32.gmra.mrb[0].mxu0 %v1428
    %v1496 = vpop.f32.mrb[0].mxu0
    %v1497 = vadd.f32 0.0, %v1496
    %v1498 = vpop.f32.mrb[0].mxu0
    %v1499 = vadd.f32 0.0, %v1498
    %1500 = vdwg.mxu0
    %1501 = vmatprep.subr.mxu0 %v52
    %1502 = vmatpush1.msra.mxu0 %v51
    %1503 = vmatprep.subr.mxu0 %v56
    %1504 = vmatpush1.msra.mxu0 %v55
    %1505 = vmatprep.subr.mxu0 0.0
    %1506 = vmatpush1.msra.mxu0 0.0
    %1507 = vmatprep.subr.mxu0 0.0
    %1508 = vmatpush1.msra.mxu0 0.0
    %1509 = vmatprep.subr.mxu0 0.0
    %1510 = vmatpush1.msra.mxu0 0.0
    %1511 = vmatprep.subr.mxu0 0.0
    %1512 = vmatpush1.msra.mxu0 0.0
    %1513 = vmatprep.subr.mxu0 0.0
    %1514 = vmatpush1.msra.mxu0 0.0
    %1515 = vmatprep.subr.mxu0 0.0
    %1516 = vmatpush1.msra.mxu0 0.0
    %1517 = vmatprep.subr.mxu0 0.0
    %1518 = vmatpush1.msra.mxu0 0.0
    %1519 = vmatprep.subr.mxu0 0.0
    %1520 = vmatpush1.msra.mxu0 0.0
    %1521 = vmatprep.subr.mxu0 0.0
    %1522 = vmatpush1.msra.mxu0 0.0
    %1523 = vmatprep.subr.mxu0 0.0
    %1524 = vmatpush1.msra.mxu0 0.0
    %1525 = vmatprep.subr.mxu0 0.0
    %1526 = vmatpush1.msra.mxu0 0.0
    %1527 = vmatprep.subr.mxu0 0.0
    %1528 = vmatpush1.msra.mxu0 0.0
    %1529 = vmatprep.subr.mxu0 0.0
    %1530 = vmatpush1.msra.mxu0 0.0
    %1531 = vmatprep.subr.mxu0 0.0
    %1532 = vmatpush1.msra.mxu0 0.0
    %1533 = vmatprep.subr.mxu0 0.0
    %1534 = vmatpush1.msra.mxu0 0.0
    %1535 = vmatprep.subr.mxu0 0.0
    %1536 = vmatpush1.msra.mxu0 0.0
    %1537 = vmatprep.subr.mxu0 0.0
    %1538 = vmatpush1.msra.mxu0 0.0
    %1539 = vmatprep.subr.mxu0 0.0
    %1540 = vmatpush1.msra.mxu0 0.0
    %1541 = vmatprep.subr.mxu0 0.0
    %1542 = vmatpush1.msra.mxu0 0.0
    %1543 = vmatprep.subr.mxu0 0.0
    %1544 = vmatpush1.msra.mxu0 0.0
    %1545 = vmatprep.subr.mxu0 0.0
    %1546 = vmatpush1.msra.mxu0 0.0
    %1547 = vmatprep.subr.mxu0 0.0
    %1548 = vmatpush1.msra.mxu0 0.0
    %1549 = vmatprep.subr.mxu0 0.0
    %1550 = vmatpush1.msra.mxu0 0.0
    %1551 = vmatprep.subr.mxu0 0.0
    %1552 = vmatpush1.msra.mxu0 0.0
    %1553 = vmatprep.subr.mxu0 0.0
    %1554 = vmatpush1.msra.mxu0 0.0
    %1555 = vmatprep.subr.mxu0 0.0
    %1556 = vmatpush1.msra.mxu0 0.0
    %1557 = vmatprep.subr.mxu0 0.0
    %1558 = vmatpush1.msra.mxu0 0.0
    %1559 = vmatprep.subr.mxu0 0.0
    %1560 = vmatpush1.msra.mxu0 0.0
    %1561 = vmatprep.subr.mxu0 0.0
    %1562 = vmatpush1.msra.mxu0 0.0
    %1563 = vmatprep.subr.mxu0 0.0
    %1564 = vmatpush1.msra.mxu0 0.0
    %1565 = vmatprep.mubr.f32.mxu0 0.0
    %1566 = vmatmul.mubr.f32.gmra.mrb[0].mxu0 %v1428
    %v1567 = vpop.f32.mrb[0].mxu0
    %v1568 = vadd.f32 0.0, %v1567
    %v1569 = vpop.f32.mrb[0].mxu0
    %v1570 = vadd.f32 0.0, %v1569
    %1571 = vdwg.mxu0
    %v1572 = vadd.f32 %v216, %v1497
    %v1573 = vadd.f32 %v218, %v1499
    %v1574 = vadd.f32 %v329, %v1568
    %v1575 = vadd.f32 %v331, %v1570
    %v1576 = vxor.u32 %v1572, 2147483648
    %v1577 = vmul.f32 %v1576, 1.442695
    %v1578 = vpow.pop %v1577
    %v1579 = vadd.f32 %v1578, 1.0
    %v1580 = vrcp.pop %v1579
    %v1581 = vmul.f32 1.0, %v1580
    %v1582 = vxor.u32 %v1573, 2147483648
    %v1583 = vmul.f32 %v1582, 1.442695
    %v1584 = vpow.pop %v1583
    %v1585 = vadd.f32 %v1584, 1.0
    %v1586 = vrcp.pop %v1585
    %v1587 = vmul.f32 1.0, %v1586
    %v1588 = vtanh.pop %v1574
    %v1589 = vxor.u32 %v1575, 2147483648
    %v1590 = vmul.f32 %v1589, 1.442695
    %v1591 = vpow.pop %v1590
    %v1592 = vadd.f32 %v1591, 1.0
    %v1593 = vrcp.pop %v1592
    %v1594 = vmul.f32 1.0, %v1593
    %v1595 = vmul.f32 %v1587, %v1426
    %v1596 = vmul.f32 %v1581, %v1588
    %v1597 = vadd.f32 %v1595, %v1596
    %v1598 = vtanh.pop %v1597
    %v1599 = vmul.f32 %v1594, %v1598
    %vm1600 = vcmp.gt.s32.totalorder %v339, 6
    %v1601 = vsel %vm1600, 1, 0
    %1602 = vset.pattern.permute.xlu0 0
    %1603 = vperm.xlu0 %1602, %v1601
    %v1604 = vpop.permute.xlu0 %1603
    %vm1605 = vcmp.eq.s32.totalorder %v1604, 1
    %v1606 = vsel %vm1605, %v1599, %v1425
    %v1607 = vsel %vm1605, %v1597, %v1426
    %v1609 = vsel %vm340, %v1606, 0
    %1611 = vmatprep.subr.mxu0 %v50
    %1612 = vmatpush1.msra.mxu0 %v49
    %1613 = vmatprep.subr.mxu0 %v54
    %1614 = vmatpush1.msra.mxu0 %v53
    %1615 = vmatprep.subr.mxu0 0.0
    %1616 = vmatpush1.msra.mxu0 0.0
    %1617 = vmatprep.subr.mxu0 0.0
    %1618 = vmatpush1.msra.mxu0 0.0
    %1619 = vmatprep.subr.mxu0 0.0
    %1620 = vmatpush1.msra.mxu0 0.0
    %1621 = vmatprep.subr.mxu0 0.0
    %1622 = vmatpush1.msra.mxu0 0.0
    %1623 = vmatprep.subr.mxu0 0.0
    %1624 = vmatpush1.msra.mxu0 0.0
    %1625 = vmatprep.subr.mxu0 0.0
    %1626 = vmatpush1.msra.mxu0 0.0
    %1627 = vmatprep.subr.mxu0 0.0
    %1628 = vmatpush1.msra.mxu0 0.0
    %1629 = vmatprep.subr.mxu0 0.0
    %1630 = vmatpush1.msra.mxu0 0.0
    %1631 = vmatprep.subr.mxu0 0.0
    %1632 = vmatpush1.msra.mxu0 0.0
    %1633 = vmatprep.subr.mxu0 0.0
    %1634 = vmatpush1.msra.mxu0 0.0
    %1635 = vmatprep.subr.mxu0 0.0
    %1636 = vmatpush1.msra.mxu0 0.0
    %1637 = vmatprep.subr.mxu0 0.0
    %1638 = vmatpush1.msra.mxu0 0.0
    %1639 = vmatprep.subr.mxu0 0.0
    %1640 = vmatpush1.msra.mxu0 0.0
    %1641 = vmatprep.subr.mxu0 0.0
    %1642 = vmatpush1.msra.mxu0 0.0
    %1643 = vmatprep.subr.mxu0 0.0
    %1644 = vmatpush1.msra.mxu0 0.0
    %1645 = vmatprep.subr.mxu0 0.0
    %1646 = vmatpush1.msra.mxu0 0.0
    %1647 = vmatprep.subr.mxu0 0.0
    %1648 = vmatpush1.msra.mxu0 0.0
    %1649 = vmatprep.subr.mxu0 0.0
    %1650 = vmatpush1.msra.mxu0 0.0
    %1651 = vmatprep.subr.mxu0 0.0
    %1652 = vmatpush1.msra.mxu0 0.0
    %1653 = vmatprep.subr.mxu0 0.0
    %1654 = vmatpush1.msra.mxu0 0.0
    %1655 = vmatprep.subr.mxu0 0.0
    %1656 = vmatpush1.msra.mxu0 0.0
    %1657 = vmatprep.subr.mxu0 0.0
    %1658 = vmatpush1.msra.mxu0 0.0
    %1659 = vmatprep.subr.mxu0 0.0
    %1660 = vmatpush1.msra.mxu0 0.0
    %1661 = vmatprep.subr.mxu0 0.0
    %1662 = vmatpush1.msra.mxu0 0.0
    %1663 = vmatprep.subr.mxu0 0.0
    %1664 = vmatpush1.msra.mxu0 0.0
    %1665 = vmatprep.subr.mxu0 0.0
    %1666 = vmatpush1.msra.mxu0 0.0
    %1667 = vmatprep.subr.mxu0 0.0
    %1668 = vmatpush1.msra.mxu0 0.0
    %1669 = vmatprep.subr.mxu0 0.0
    %1670 = vmatpush1.msra.mxu0 0.0
    %1671 = vmatprep.subr.mxu0 0.0
    %1672 = vmatpush1.msra.mxu0 0.0
    %1673 = vmatprep.subr.mxu0 0.0
    %1674 = vmatpush1.msra.mxu0 0.0
    %1675 = vmatprep.mubr.f32.mxu0 0.0
    %1676 = vmatmul.mubr.f32.gmra.mrb[0].mxu0 %v1609
    %v1677 = vpop.f32.mrb[0].mxu0
    %v1678 = vadd.f32 0.0, %v1677
    %v1679 = vpop.f32.mrb[0].mxu0
    %v1680 = vadd.f32 0.0, %v1679
    %1681 = vdwg.mxu0
    %1682 = vmatprep.subr.mxu0 %v52
    %1683 = vmatpush1.msra.mxu0 %v51
    %1684 = vmatprep.subr.mxu0 %v56
    %1685 = vmatpush1.msra.mxu0 %v55
    %1686 = vmatprep.subr.mxu0 0.0
    %1687 = vmatpush1.msra.mxu0 0.0
    %1688 = vmatprep.subr.mxu0 0.0
    %1689 = vmatpush1.msra.mxu0 0.0
    %1690 = vmatprep.subr.mxu0 0.0
    %1691 = vmatpush1.msra.mxu0 0.0
    %1692 = vmatprep.subr.mxu0 0.0
    %1693 = vmatpush1.msra.mxu0 0.0
    %1694 = vmatprep.subr.mxu0 0.0
    %1695 = vmatpush1.msra.mxu0 0.0
    %1696 = vmatprep.subr.mxu0 0.0
    %1697 = vmatpush1.msra.mxu0 0.0
    %1698 = vmatprep.subr.mxu0 0.0
    %1699 = vmatpush1.msra.mxu0 0.0
    %1700 = vmatprep.subr.mxu0 0.0
    %1701 = vmatpush1.msra.mxu0 0.0
    %1702 = vmatprep.subr.mxu0 0.0
    %1703 = vmatpush1.msra.mxu0 0.0
    %1704 = vmatprep.subr.mxu0 0.0
    %1705 = vmatpush1.msra.mxu0 0.0
    %1706 = vmatprep.subr.mxu0 0.0
    %1707 = vmatpush1.msra.mxu0 0.0
    %1708 = vmatprep.subr.mxu0 0.0
    %1709 = vmatpush1.msra.mxu0 0.0
    %1710 = vmatprep.subr.mxu0 0.0
    %1711 = vmatpush1.msra.mxu0 0.0
    %1712 = vmatprep.subr.mxu0 0.0
    %1713 = vmatpush1.msra.mxu0 0.0
    %1714 = vmatprep.subr.mxu0 0.0
    %1715 = vmatpush1.msra.mxu0 0.0
    %1716 = vmatprep.subr.mxu0 0.0
    %1717 = vmatpush1.msra.mxu0 0.0
    %1718 = vmatprep.subr.mxu0 0.0
    %1719 = vmatpush1.msra.mxu0 0.0
    %1720 = vmatprep.subr.mxu0 0.0
    %1721 = vmatpush1.msra.mxu0 0.0
    %1722 = vmatprep.subr.mxu0 0.0
    %1723 = vmatpush1.msra.mxu0 0.0
    %1724 = vmatprep.subr.mxu0 0.0
    %1725 = vmatpush1.msra.mxu0 0.0
    %1726 = vmatprep.subr.mxu0 0.0
    %1727 = vmatpush1.msra.mxu0 0.0
    %1728 = vmatprep.subr.mxu0 0.0
    %1729 = vmatpush1.msra.mxu0 0.0
    %1730 = vmatprep.subr.mxu0 0.0
    %1731 = vmatpush1.msra.mxu0 0.0
    %1732 = vmatprep.subr.mxu0 0.0
    %1733 = vmatpush1.msra.mxu0 0.0
    %1734 = vmatprep.subr.mxu0 0.0
    %1735 = vmatpush1.msra.mxu0 0.0
    %1736 = vmatprep.subr.mxu0 0.0
    %1737 = vmatpush1.msra.mxu0 0.0
    %1738 = vmatprep.subr.mxu0 0.0
    %1739 = vmatpush1.msra.mxu0 0.0
    %1740 = vmatprep.subr.mxu0 0.0
    %1741 = vmatpush1.msra.mxu0 0.0
    %1742 = vmatprep.subr.mxu0 0.0
    %1743 = vmatpush1.msra.mxu0 0.0
    %1744 = vmatprep.subr.mxu0 0.0
    %1745 = vmatpush1.msra.mxu0 0.0
    %1746 = vmatprep.mubr.f32.mxu0 0.0
    %1747 = vmatmul.mubr.f32.gmra.mrb[0].mxu0 %v1609
    %v1748 = vpop.f32.mrb[0].mxu0
    %v1749 = vadd.f32 0.0, %v1748
    %v1750 = vpop.f32.mrb[0].mxu0
    %v1751 = vadd.f32 0.0, %v1750
    %1752 = vdwg.mxu0
    %v1753 = vadd.f32 %v222, %v1678
    %v1754 = vadd.f32 %v224, %v1680
    %v1755 = vadd.f32 %v335, %v1749
    %v1756 = vadd.f32 %v337, %v1751
    %v1757 = vxor.u32 %v1753, 2147483648
    %v1758 = vmul.f32 %v1757, 1.442695
    %v1759 = vpow.pop %v1758
    %v1760 = vadd.f32 %v1759, 1.0
    %v1761 = vrcp.pop %v1760
    %v1762 = vmul.f32 1.0, %v1761
    %v1763 = vxor.u32 %v1754, 2147483648
    %v1764 = vmul.f32 %v1763, 1.442695
    %v1765 = vpow.pop %v1764
    %v1766 = vadd.f32 %v1765, 1.0
    %v1767 = vrcp.pop %v1766
    %v1768 = vmul.f32 1.0, %v1767
    %v1769 = vtanh.pop %v1755
    %v1770 = vxor.u32 %v1756, 2147483648
    %v1771 = vmul.f32 %v1770, 1.442695
    %v1772 = vpow.pop %v1771
    %v1773 = vadd.f32 %v1772, 1.0
    %v1774 = vrcp.pop %v1773
    %v1775 = vmul.f32 1.0, %v1774
    %v1776 = vmul.f32 %v1768, %v1607
    %v1777 = vmul.f32 %v1762, %v1769
    %v1778 = vadd.f32 %v1776, %v1777
    %v1779 = vtanh.pop %v1778
    %v1780 = vmul.f32 %v1775, %v1779
    %vm1781 = vcmp.gt.s32.totalorder %v339, 7
    %v1782 = vsel %vm1781, 1, 0
    %1783 = vset.pattern.permute.xlu0 0
    %1784 = vperm.xlu0 %1783, %v1782
    %v1785 = vpop.permute.xlu0 %1784
    %vm1786 = vcmp.eq.s32.totalorder %v1785, 1
    %v1787 = vsel %vm1786, %v1780, %v1606
    %v1788 = vld [vmem:[#allocation4] sm:$0xff]
    %v1789 = vld [vmem:[#allocation4 + $0x8] sm:$0xff]
    %v1790 = vld [vmem:[#allocation4 + $0x10] sm:$0x1]
    %v1791 = vld [vmem:[#allocation4 + $0x18] sm:$0xff]
    %v1792 = vld [vmem:[#allocation4 + $0x20] sm:$0xff]
    %v1793 = vld [vmem:[#allocation4 + $0x28] sm:$0x1]
    %v1794 = vld [vmem:[#allocation4 + $0x30] sm:$0xff]
    %v1795 = vld [vmem:[#allocation4 + $0x38] sm:$0xff]
    %v1796 = vld [vmem:[#allocation4 + $0x40] sm:$0xff]
    %v1797 = vld [vmem:[#allocation4 + $0x48] sm:$0xff]
    %v1798 = vld [vmem:[#allocation4 + $0x50] sm:$0x1]
    %v1799 = vld [vmem:[#allocation4 + $0x58] sm:$0xff]
    %v1800 = vld [vmem:[#allocation4 + $0x60] sm:$0xff]
    %v1801 = vld [vmem:[#allocation4 + $0x68] sm:$0xff]
    %v1802 = vld [vmem:[#allocation4 + $0x70] sm:$0xff]
    %v1803 = vld [vmem:[#allocation4 + $0x78] sm:$0x1]
    %v1804 = vlaneseq
    %v1805 = vshrl.u32 %v1804, 7
    %v1806 = vsub.s32 0, %v1805
    %v1807 = vrot.slane %v1790, %v1806
    %v1809 = vsel %vm340, %v1787, 0
    %1811 = vmatprep.subr.mxu0 0.0
    %1812 = vmatpush1.msra.mxu0 %v1788
    %1813 = vmatprep.subr.mxu0 0.0
    %1814 = vmatpush1.msra.mxu0 %v1789
    %1815 = vmatprep.subr.mxu0 0.0
    %1816 = vmatpush1.msra.mxu0 0.0
    %1817 = vmatprep.subr.mxu0 0.0
    %1818 = vmatpush1.msra.mxu0 0.0
    %1819 = vmatprep.subr.mxu0 0.0
    %1820 = vmatpush1.msra.mxu0 0.0
    %1821 = vmatprep.subr.mxu0 0.0
    %1822 = vmatpush1.msra.mxu0 0.0
    %1823 = vmatprep.subr.mxu0 0.0
    %1824 = vmatpush1.msra.mxu0 0.0
    %1825 = vmatprep.subr.mxu0 0.0
    %1826 = vmatpush1.msra.mxu0 0.0
    %1827 = vmatprep.subr.mxu0 0.0
    %1828 = vmatpush1.msra.mxu0 0.0
    %1829 = vmatprep.subr.mxu0 0.0
    %1830 = vmatpush1.msra.mxu0 0.0
    %1831 = vmatprep.subr.mxu0 0.0
    %1832 = vmatpush1.msra.mxu0 0.0
    %1833 = vmatprep.subr.mxu0 0.0
    %1834 = vmatpush1.msra.mxu0 0.0
    %1835 = vmatprep.subr.mxu0 0.0
    %1836 = vmatpush1.msra.mxu0 0.0
    %1837 = vmatprep.subr.mxu0 0.0
    %1838 = vmatpush1.msra.mxu0 0.0
    %1839 = vmatprep.subr.mxu0 0.0
    %1840 = vmatpush1.msra.mxu0 0.0
    %1841 = vmatprep.subr.mxu0 0.0
    %1842 = vmatpush1.msra.mxu0 0.0
    %1843 = vmatprep.subr.mxu0 0.0
    %1844 = vmatpush1.msra.mxu0 0.0
    %1845 = vmatprep.subr.mxu0 0.0
    %1846 = vmatpush1.msra.mxu0 0.0
    %1847 = vmatprep.subr.mxu0 0.0
    %1848 = vmatpush1.msra.mxu0 0.0
    %1849 = vmatprep.subr.mxu0 0.0
    %1850 = vmatpush1.msra.mxu0 0.0
    %1851 = vmatprep.subr.mxu0 0.0
    %1852 = vmatpush1.msra.mxu0 0.0
    %1853 = vmatprep.subr.mxu0 0.0
    %1854 = vmatpush1.msra.mxu0 0.0
    %1855 = vmatprep.subr.mxu0 0.0
    %1856 = vmatpush1.msra.mxu0 0.0
    %1857 = vmatprep.subr.mxu0 0.0
    %1858 = vmatpush1.msra.mxu0 0.0
    %1859 = vmatprep.subr.mxu0 0.0
    %1860 = vmatpush1.msra.mxu0 0.0
    %1861 = vmatprep.subr.mxu0 0.0
    %1862 = vmatpush1.msra.mxu0 0.0
    %1863 = vmatprep.subr.mxu0 0.0
    %1864 = vmatpush1.msra.mxu0 0.0
    %1865 = vmatprep.subr.mxu0 0.0
    %1866 = vmatpush1.msra.mxu0 0.0
    %1867 = vmatprep.subr.mxu0 0.0
    %1868 = vmatpush1.msra.mxu0 0.0
    %1869 = vmatprep.subr.mxu0 0.0
    %1870 = vmatpush1.msra.mxu0 0.0
    %1871 = vmatprep.subr.mxu0 0.0
    %1872 = vmatpush1.msra.mxu0 0.0
    %1873 = vmatprep.subr.mxu0 0.0
    %1874 = vmatpush1.msra.mxu0 0.0
    %1875 = vmatprep.mubr.f32.mxu0 0.0
    %1876 = vmatmul.mubr.f32.gmra.mrb[0].mxu0 %v1809
    %v1877 = vpop.f32.mrb[0].mxu0
    %v1878 = vadd.f32 %v1807, %v1877
    %v1879 = vpop.f32.mrb[0].mxu0
    %1880 = vdwg.mxu0
    %v1881 = vlaneseq
    %v1882 = vshrl.u32 %v1881, 7
    %v1883 = vsub.s32 0, %v1882
    %v1884 = vrot.slane %v1793, %v1883
    %v1886 = vsel %vm340, %v1878, 0
    %1888 = vmatprep.subr.mxu0 0.0
    %1889 = vmatpush1.msra.mxu0 %v1791
    %1890 = vmatprep.subr.mxu0 0.0
    %1891 = vmatpush1.msra.mxu0 %v1792
    %1892 = vmatprep.subr.mxu0 0.0
    %1893 = vmatpush1.msra.mxu0 0.0
    %1894 = vmatprep.subr.mxu0 0.0
    %1895 = vmatpush1.msra.mxu0 0.0
    %1896 = vmatprep.subr.mxu0 0.0
    %1897 = vmatpush1.msra.mxu0 0.0
    %1898 = vmatprep.subr.mxu0 0.0
    %1899 = vmatpush1.msra.mxu0 0.0
    %1900 = vmatprep.subr.mxu0 0.0
    %1901 = vmatpush1.msra.mxu0 0.0
    %1902 = vmatprep.subr.mxu0 0.0
    %1903 = vmatpush1.msra.mxu0 0.0
    %1904 = vmatprep.subr.mxu0 0.0
    %1905 = vmatpush1.msra.mxu0 0.0
    %1906 = vmatprep.subr.mxu0 0.0
    %1907 = vmatpush1.msra.mxu0 0.0
    %1908 = vmatprep.subr.mxu0 0.0
    %1909 = vmatpush1.msra.mxu0 0.0
    %1910 = vmatprep.subr.mxu0 0.0
    %1911 = vmatpush1.msra.mxu0 0.0
    %1912 = vmatprep.subr.mxu0 0.0
    %1913 = vmatpush1.msra.mxu0 0.0
    %1914 = vmatprep.subr.mxu0 0.0
    %1915 = vmatpush1.msra.mxu0 0.0
    %1916 = vmatprep.subr.mxu0 0.0
    %1917 = vmatpush1.msra.mxu0 0.0
    %1918 = vmatprep.subr.mxu0 0.0
    %1919 = vmatpush1.msra.mxu0 0.0
    %1920 = vmatprep.subr.mxu0 0.0
    %1921 = vmatpush1.msra.mxu0 0.0
    %1922 = vmatprep.subr.mxu0 0.0
    %1923 = vmatpush1.msra.mxu0 0.0
    %1924 = vmatprep.subr.mxu0 0.0
    %1925 = vmatpush1.msra.mxu0 0.0
    %1926 = vmatprep.subr.mxu0 0.0
    %1927 = vmatpush1.msra.mxu0 0.0
    %1928 = vmatprep.subr.mxu0 0.0
    %1929 = vmatpush1.msra.mxu0 0.0
    %1930 = vmatprep.subr.mxu0 0.0
    %1931 = vmatpush1.msra.mxu0 0.0
    %1932 = vmatprep.subr.mxu0 0.0
    %1933 = vmatpush1.msra.mxu0 0.0
    %1934 = vmatprep.subr.mxu0 0.0
    %1935 = vmatpush1.msra.mxu0 0.0
    %1936 = vmatprep.subr.mxu0 0.0
    %1937 = vmatpush1.msra.mxu0 0.0
    %1938 = vmatprep.subr.mxu0 0.0
    %1939 = vmatpush1.msra.mxu0 0.0
    %1940 = vmatprep.subr.mxu0 0.0
    %1941 = vmatpush1.msra.mxu0 0.0
    %1942 = vmatprep.subr.mxu0 0.0
    %1943 = vmatpush1.msra.mxu0 0.0
    %1944 = vmatprep.subr.mxu0 0.0
    %1945 = vmatpush1.msra.mxu0 0.0
    %1946 = vmatprep.subr.mxu0 0.0
    %1947 = vmatpush1.msra.mxu0 0.0
    %1948 = vmatprep.subr.mxu0 0.0
    %1949 = vmatpush1.msra.mxu0 0.0
    %1950 = vmatprep.subr.mxu0 0.0
    %1951 = vmatpush1.msra.mxu0 0.0
    %1952 = vmatprep.mubr.f32.mxu0 0.0
    %1953 = vmatmul.mubr.f32.gmra.mrb[0].mxu0 %v1886
    %v1954 = vpop.f32.mrb[0].mxu0
    %v1955 = vadd.f32 %v1884, %v1954
    %v1956 = vpop.f32.mrb[0].mxu0
    %1957 = vdwg.mxu0
    %v1958 = vtanh.pop %v1955
    %v1959 = vlaneseq
    %v1960 = vshrl.u32 %v1959, 7
    %v1961 = vsub.s32 0, %v1960
    %v1962 = vrot.slane %v1798, %v1961
    %vm1963 = vcmask 261120
    %v1965 = vsel %vm1963, %v1958, 0
    %1967 = vmatprep.subr.mxu0 0.0
    %1968 = vmatpush1.msra.mxu0 %v1794
    %1969 = vmatprep.subr.mxu0 0.0
    %1970 = vmatpush1.msra.mxu0 %v1795
    %1971 = vmatprep.subr.mxu0 0.0
    %1972 = vmatpush1.msra.mxu0 %v1796
    %1973 = vmatprep.subr.mxu0 0.0
    %1974 = vmatpush1.msra.mxu0 %v1797
    %1975 = vmatprep.subr.mxu0 0.0
    %1976 = vmatpush1.msra.mxu0 0.0
    %1977 = vmatprep.subr.mxu0 0.0
    %1978 = vmatpush1.msra.mxu0 0.0
    %1979 = vmatprep.subr.mxu0 0.0
    %1980 = vmatpush1.msra.mxu0 0.0
    %1981 = vmatprep.subr.mxu0 0.0
    %1982 = vmatpush1.msra.mxu0 0.0
    %1983 = vmatprep.subr.mxu0 0.0
    %1984 = vmatpush1.msra.mxu0 0.0
    %1985 = vmatprep.subr.mxu0 0.0
    %1986 = vmatpush1.msra.mxu0 0.0
    %1987 = vmatprep.subr.mxu0 0.0
    %1988 = vmatpush1.msra.mxu0 0.0
    %1989 = vmatprep.subr.mxu0 0.0
    %1990 = vmatpush1.msra.mxu0 0.0
    %1991 = vmatprep.subr.mxu0 0.0
    %1992 = vmatpush1.msra.mxu0 0.0
    %1993 = vmatprep.subr.mxu0 0.0
    %1994 = vmatpush1.msra.mxu0 0.0
    %1995 = vmatprep.subr.mxu0 0.0
    %1996 = vmatpush1.msra.mxu0 0.0
    %1997 = vmatprep.subr.mxu0 0.0
    %1998 = vmatpush1.msra.mxu0 0.0
    %1999 = vmatprep.subr.mxu0 0.0
    %2000 = vmatpush1.msra.mxu0 0.0
    %2001 = vmatprep.subr.mxu0 0.0
    %2002 = vmatpush1.msra.mxu0 0.0
    %2003 = vmatprep.subr.mxu0 0.0
    %2004 = vmatpush1.msra.mxu0 0.0
    %2005 = vmatprep.subr.mxu0 0.0
    %2006 = vmatpush1.msra.mxu0 0.0
    %2007 = vmatprep.subr.mxu0 0.0
    %2008 = vmatpush1.msra.mxu0 0.0
    %2009 = vmatprep.subr.mxu0 0.0
    %2010 = vmatpush1.msra.mxu0 0.0
    %2011 = vmatprep.subr.mxu0 0.0
    %2012 = vmatpush1.msra.mxu0 0.0
    %2013 = vmatprep.subr.mxu0 0.0
    %2014 = vmatpush1.msra.mxu0 0.0
    %2015 = vmatprep.subr.mxu0 0.0
    %2016 = vmatpush1.msra.mxu0 0.0
    %2017 = vmatprep.subr.mxu0 0.0
    %2018 = vmatpush1.msra.mxu0 0.0
    %2019 = vmatprep.subr.mxu0 0.0
    %2020 = vmatpush1.msra.mxu0 0.0
    %2021 = vmatprep.subr.mxu0 0.0
    %2022 = vmatpush1.msra.mxu0 0.0
    %2023 = vmatprep.subr.mxu0 0.0
    %2024 = vmatpush1.msra.mxu0 0.0
    %2025 = vmatprep.subr.mxu0 0.0
    %2026 = vmatpush1.msra.mxu0 0.0
    %2027 = vmatprep.subr.mxu0 0.0
    %2028 = vmatpush1.msra.mxu0 0.0
    %2029 = vmatprep.subr.mxu0 0.0
    %2030 = vmatpush1.msra.mxu0 0.0
    %2031 = vmatprep.mubr.f32.mxu0 0.0
    %2032 = vmatmul.mubr.f32.gmra.mrb[0].mxu0 %v1965
    %v2033 = vpop.f32.mrb[0].mxu0
    %v2034 = vadd.f32 %v1962, %v2033
    %v2035 = vpop.f32.mrb[0].mxu0
    %2036 = vdwg.mxu0
    %v2037 = vtanh.pop %v2034
    %v2038 = vlaneseq
    %v2039 = vshrl.u32 %v2038, 7
    %v2040 = vsub.s32 0, %v2039
    %v2041 = vrot.slane %v1803, %v2040
    %v2043 = vsel %vm1963, %v2037, 0
    %2045 = vmatprep.subr.mxu0 0.0
    %2046 = vmatpush1.msra.mxu0 %v1799
    %2047 = vmatprep.subr.mxu0 0.0
    %2048 = vmatpush1.msra.mxu0 %v1800
    %2049 = vmatprep.subr.mxu0 0.0
    %2050 = vmatpush1.msra.mxu0 %v1801
    %2051 = vmatprep.subr.mxu0 0.0
    %2052 = vmatpush1.msra.mxu0 %v1802
    %2053 = vmatprep.subr.mxu0 0.0
    %2054 = vmatpush1.msra.mxu0 0.0
    %2055 = vmatprep.subr.mxu0 0.0
    %2056 = vmatpush1.msra.mxu0 0.0
    %2057 = vmatprep.subr.mxu0 0.0
    %2058 = vmatpush1.msra.mxu0 0.0
    %2059 = vmatprep.subr.mxu0 0.0
    %2060 = vmatpush1.msra.mxu0 0.0
    %2061 = vmatprep.subr.mxu0 0.0
    %2062 = vmatpush1.msra.mxu0 0.0
    %2063 = vmatprep.subr.mxu0 0.0
    %2064 = vmatpush1.msra.mxu0 0.0
    %2065 = vmatprep.subr.mxu0 0.0
    %2066 = vmatpush1.msra.mxu0 0.0
    %2067 = vmatprep.subr.mxu0 0.0
    %2068 = vmatpush1.msra.mxu0 0.0
    %2069 = vmatprep.subr.mxu0 0.0
    %2070 = vmatpush1.msra.mxu0 0.0
    %2071 = vmatprep.subr.mxu0 0.0
    %2072 = vmatpush1.msra.mxu0 0.0
    %2073 = vmatprep.subr.mxu0 0.0
    %2074 = vmatpush1.msra.mxu0 0.0
    %2075 = vmatprep.subr.mxu0 0.0
    %2076 = vmatpush1.msra.mxu0 0.0
    %2077 = vmatprep.subr.mxu0 0.0
    %2078 = vmatpush1.msra.mxu0 0.0
    %2079 = vmatprep.subr.mxu0 0.0
    %2080 = vmatpush1.msra.mxu0 0.0
    %2081 = vmatprep.subr.mxu0 0.0
    %2082 = vmatpush1.msra.mxu0 0.0
    %2083 = vmatprep.subr.mxu0 0.0
    %2084 = vmatpush1.msra.mxu0 0.0
    %2085 = vmatprep.subr.mxu0 0.0
    %2086 = vmatpush1.msra.mxu0 0.0
    %2087 = vmatprep.subr.mxu0 0.0
    %2088 = vmatpush1.msra.mxu0 0.0
    %2089 = vmatprep.subr.mxu0 0.0
    %2090 = vmatpush1.msra.mxu0 0.0
    %2091 = vmatprep.subr.mxu0 0.0
    %2092 = vmatpush1.msra.mxu0 0.0
    %2093 = vmatprep.subr.mxu0 0.0
    %2094 = vmatpush1.msra.mxu0 0.0
    %2095 = vmatprep.subr.mxu0 0.0
    %2096 = vmatpush1.msra.mxu0 0.0
    %2097 = vmatprep.subr.mxu0 0.0
    %2098 = vmatpush1.msra.mxu0 0.0
    %2099 = vmatprep.subr.mxu0 0.0
    %2100 = vmatpush1.msra.mxu0 0.0
    %2101 = vmatprep.subr.mxu0 0.0
    %2102 = vmatpush1.msra.mxu0 0.0
    %2103 = vmatprep.subr.mxu0 0.0
    %2104 = vmatpush1.msra.mxu0 0.0
    %2105 = vmatprep.subr.mxu0 0.0
    %2106 = vmatpush1.msra.mxu0 0.0
    %2107 = vmatprep.subr.mxu0 0.0
    %2108 = vmatpush1.msra.mxu0 0.0
    %2109 = vmatprep.mubr.f32.mxu0 0.0
    %2110 = vmatmul.mubr.f32.gmra.mrb[0].mxu0 %v2043
    %v2111 = vpop.f32.mrb[0].mxu0
    %v2112 = vadd.f32 %v2041, %v2111
    %v2113 = vpop.f32.mrb[0].mxu0
    %2114 = vdwg.mxu0
    %2115 = vst [vmem:[%s4] sm:$0xff] %v2112
    // Predicated region
    $region26: #{_lambda_.1} parent=1 // pred_check
      _
    $region27: #{_lambda_.1} parent=1 // pred_check_branch
      %2117 = sbr.rel (0) target = $region29
    $region28: #{_lambda_.1} parent=1 // pred_region
      _
    $region29: #{_lambda_.1} parent=1 // pred_fallthru
      _
    // Predicated region
    $region30: #{_lambda_.1} parent=1 // pred_check
      _
    $region31: #{_lambda_.1} parent=1 // pred_check_branch
      %2119 = sbr.rel (0) target = $region33
    $region32: #{_lambda_.1} parent=1 // pred_region
      _
    $region33: #{_lambda_.1} parent=1 // pred_fallthru
      _
    %2120 = vsyncpa [#allocation3], 1
    %2121 = vsyncpa [#allocation5], 1

</llo_original>
